<compile_context>
chip_gen: v5e
topology: v5e:2x2
jax: 0.10.0
libtpu: 0.0.40
codegen_flags: <defaults>
</compile_context>

<pallas_src>
import functools
import math

import jax
import jax.numpy as jnp
from jax.experimental import pallas as pl
from jax.experimental.pallas import tpu as pltpu

LANE = 128  # vreg lane width


def _round_up(n, m):
    return ((n + m - 1) // m) * m


def fused_lstm_fc_kernel(*refs, num_layers, seq_len, hidden_size):
    """Fused multi-layer LSTM + final Linear, fully VMEM-resident.

    refs (positional):
      x_ref                 (T, B, D_in)            time-major input
      [w_ih, w_hh, b] * L   (D_l, 4H), (H, 4H), (1, 4H)   gate order i,f,g,o
      fc_w, fc_b            (H, Op), (1, Op)
      out_ref               (B, Op)
    """
    L, T, H = num_layers, seq_len, hidden_size
    x_ref = refs[0]
    w_refs = refs[1:1 + 3 * L]
    fc_w_ref = refs[1 + 3 * L]
    fc_b_ref = refs[2 + 3 * L]
    out_ref = refs[3 + 3 * L]

    B = x_ref.shape[1]

    # Hoist every weight / bias load out of the unrolled recurrence: with the
    # single-slab packing this is ~19 vregs total, comfortably register-resident.
    w_ih = [w_refs[3 * l + 0][...] for l in range(L)]
    w_hh = [w_refs[3 * l + 1][...] for l in range(L)]
    bias = [w_refs[3 * l + 2][...] for l in range(L)]

    def cell(gates, c):
        # One sigmoid pass over the packed [i|f|g|o] slab, one tanh for g,
        # one tanh for the new cell state: ~3 EUP vreg passes per step.
        sg = jax.nn.sigmoid(gates)
        i_g = sg[:, 0 * H:1 * H]
        f_g = sg[:, 1 * H:2 * H]
        o_g = sg[:, 3 * H:4 * H]
        g_g = jnp.tanh(gates[:, 2 * H:3 * H])
        c_new = f_g * c + i_g * g_g
        h_new = o_g * jnp.tanh(c_new)
        return h_new, c_new

    hs = [jnp.zeros((B, H), jnp.float32) for _ in range(L)]
    cs = [jnp.zeros((B, H), jnp.float32) for _ in range(L)]

    # Layer wavefront: at iteration t, layer l runs its step (t - l).  Every
    # active cell in an iteration only depends on values produced in the
    # previous iteration, so the L dependence chains overlap (serial depth
    # ~ T + L - 1 instead of L * T).  T and L are small + static => the loop
    # is fully unrolled straight-line code for the LLO scheduler.
    for t in range(T + L - 1):
        h_prev = list(hs)  # snapshot: layer l consumes h_prev[l-1] == h_{l-1}[t-l]
        for l in range(L):
            s = t - l
            if 0 <= s < T:
                if l == 0:
                    x_in = x_ref[s]        # (B, D_in) — tiny dot, off the critical path
                else:
                    x_in = h_prev[l - 1]   # (B, H) from the previous iteration
                gates = (
                    jnp.dot(x_in, w_ih[l], preferred_element_type=jnp.float32)
                    + jnp.dot(h_prev[l], w_hh[l], preferred_element_type=jnp.float32)
                    + bias[l]
                )
                hs[l], cs[l] = cell(gates, cs[l])

    # Final linear head on the last timestep's hidden state of the top layer.
    out_ref[...] = (
        jnp.dot(hs[L - 1], fc_w_ref[...], preferred_element_type=jnp.float32)
        + fc_b_ref[...]
    )


_VMEM = pl.BlockSpec(memory_space=pltpu.MemorySpace.VMEM)


@functools.partial(jax.jit, static_argnames=("output_size",))
def lstm_predictor_forward(x, packed, *, output_size):
    """x: (B, T, input_size) f32 (batch_first, like PyTorch). Returns (B, 1, O)."""
    B, T, D = x.shape
    layers = packed["lstm_layers"]
    num_layers = len(layers)
    H = layers[0][1].shape[0]
    Op = packed["fc_w"].shape[1]

    # Only remaining host-side prep: one transpose of 768 floats (no batch
    # padding, no flatten).  The final slice below is one op on (B, 128).
    x_tm = jnp.transpose(x, (1, 0, 2))  # (T, B, D)

    flat_w = [w for layer in layers for w in layer]
    n_in = 1 + len(flat_w) + 2

    kernel = functools.partial(
        fused_lstm_fc_kernel, num_layers=num_layers, seq_len=T, hidden_size=H)

    out = pl.pallas_call(
        kernel,
        out_shape=jax.ShapeDtypeStruct((B, Op), jnp.float32),
        in_specs=[_VMEM] * n_in,
        out_specs=_VMEM,
    )(x_tm, *flat_w, packed["fc_w"], packed["fc_b"])

    return out[:, None, :output_size]


def init_params(key, input_size, hidden_size, num_layers, output_size):
    """PyTorch-style U(-1/sqrt(H), 1/sqrt(H)) init; logical (unpadded) layout."""
    k = 1.0 / math.sqrt(hidden_size)
    layers = []
    for layer in range(num_layers):
        d_in = input_size if layer == 0 else hidden_size
        key, k1, k2, k3, k4 = jax.random.split(key, 5)
        w_ih = jax.random.uniform(k1, (4 * hidden_size, d_in), jnp.float32, -k, k)
        w_hh = jax.random.uniform(k2, (4 * hidden_size, hidden_size), jnp.float32, -k, k)
        b_ih = jax.random.uniform(k3, (4 * hidden_size,), jnp.float32, -k, k)
        b_hh = jax.random.uniform(k4, (4 * hidden_size,), jnp.float32, -k, k)
        # Pre-transpose for row-major x @ W matmuls; fold the two biases.
        layers.append((w_ih.T, w_hh.T, (b_ih + b_hh)[None, :]))
    key, k5, k6 = jax.random.split(key, 3)
    fc_w = jax.random.uniform(k5, (output_size, hidden_size), jnp.float32, -k, k)
    fc_b = jax.random.uniform(k6, (output_size,), jnp.float32, -k, k)
    return {"lstm_layers": layers, "fc_w_t": fc_w.T, "fc_b": fc_b[None, :]}


def pack_params(params, hidden_size, output_size):
    """One-time packing.  With H=32 the four gates exactly fill one 128-lane
    slab (4*H == LANE), so the LSTM weights need no padding at all; only the
    FC head is padded to a lane-dense (H, 128) slab for an unmasked output
    store."""
    H = hidden_size
    Op = _round_up(output_size, LANE)
    packed_layers = [
        tuple(jnp.asarray(w, jnp.float32) for w in layer)
        for layer in params["lstm_layers"]
    ]
    fc_w_p = jnp.zeros((H, Op), jnp.float32).at[:, :output_size].set(params["fc_w_t"])
    fc_b_p = jnp.zeros((1, Op), jnp.float32).at[:, :output_size].set(params["fc_b"])
    return {"lstm_layers": packed_layers, "fc_w": fc_w_p, "fc_b": fc_b_p}


def _reference_forward(x, params):
    """Pure-JAX reference (same math, unpadded) for the correctness check."""
    xs = jnp.transpose(x, (1, 0, 2))  # (T, B, D)
    for (w_ih_t, w_hh_t, b) in params["lstm_layers"]:
        H = w_hh_t.shape[0]
        B = xs.shape[1]

        def step(carry, xt):
            h, c = carry
            gates = xt @ w_ih_t + h @ w_hh_t + b
            i = jax.nn.sigmoid(gates[:, 0:H])
            f = jax.nn.sigmoid(gates[:, H:2 * H])
            g = jnp.tanh(gates[:, 2 * H:3 * H])
            o = jax.nn.sigmoid(gates[:, 3 * H:4 * H])
            c = f * c + i * g
            h = o * jnp.tanh(c)
            return (h, c), h

        init = (jnp.zeros((B, H), jnp.float32), jnp.zeros((B, H), jnp.float32))
        _, hs = jax.lax.scan(step, init, xs)
        xs = hs
    out = xs[-1] @ params["fc_w_t"] + params["fc_b"]
    return out[:, None, :]


if __name__ == "__main__":
    # Small shapes consistent with the module (seq_len=12 per __init__).
    batch, seq_len = 2, 12
    input_size, hidden_size, num_layers, output_size = 8, 32, 2, 1

    key = jax.random.PRNGKey(0)
    key, xkey = jax.random.split(key)
    x = jax.random.normal(xkey, (batch, seq_len, input_size), jnp.float32)

    params = init_params(key, input_size, hidden_size, num_layers, output_size)
    packed = pack_params(params, hidden_size, output_size)

    out = lstm_predictor_forward(x, packed, output_size=output_size)
    out = jax.block_until_ready(out)

    assert out.shape == (batch, 1, output_size), out.shape

    ref = _reference_forward(x, params)
    assert jnp.allclose(out, ref, atol=1e-5, rtol=1e-5), (out, ref)

    print("KERNEL_OK")
</pallas_src>

<mosaic_0001>
module attributes {stable_mosaic.version = 11 : i64} {
  func.func @fused_lstm_fc_kernel(%arg0: memref<12x2x8xf32, #tpu.memory_space<vmem>>, %arg1: memref<8x128xf32, #tpu.memory_space<vmem>>, %arg2: memref<32x128xf32, #tpu.memory_space<vmem>>, %arg3: memref<1x128xf32, #tpu.memory_space<vmem>>, %arg4: memref<32x128xf32, #tpu.memory_space<vmem>>, %arg5: memref<32x128xf32, #tpu.memory_space<vmem>>, %arg6: memref<1x128xf32, #tpu.memory_space<vmem>>, %arg7: memref<32x128xf32, #tpu.memory_space<vmem>>, %arg8: memref<1x128xf32, #tpu.memory_space<vmem>>, %arg9: memref<2x128xf32, #tpu.memory_space<vmem>>) attributes {dimension_semantics = [], scalar_prefetch = 0 : i64, scratch_operands = 0 : i64, tpu.core_type = #tpu.core_type<tc>} {
    %c0 = arith.constant 0 : index
    %c0_0 = arith.constant 0 : index
    %0 = vector.load %arg1[%c0, %c0_0] : memref<8x128xf32, #tpu.memory_space<vmem>>, vector<8x128xf32>
    %c0_1 = arith.constant 0 : index
    %c0_2 = arith.constant 0 : index
    %1 = vector.load %arg4[%c0_1, %c0_2] : memref<32x128xf32, #tpu.memory_space<vmem>>, vector<32x128xf32>
    %c0_3 = arith.constant 0 : index
    %c0_4 = arith.constant 0 : index
    %2 = vector.load %arg2[%c0_3, %c0_4] : memref<32x128xf32, #tpu.memory_space<vmem>>, vector<32x128xf32>
    %c0_5 = arith.constant 0 : index
    %c0_6 = arith.constant 0 : index
    %3 = vector.load %arg5[%c0_5, %c0_6] : memref<32x128xf32, #tpu.memory_space<vmem>>, vector<32x128xf32>
    %c0_7 = arith.constant 0 : index
    %c0_8 = arith.constant 0 : index
    %4 = vector.load %arg3[%c0_7, %c0_8] : memref<1x128xf32, #tpu.memory_space<vmem>>, vector<1x128xf32>
    %c0_9 = arith.constant 0 : index
    %c0_10 = arith.constant 0 : index
    %5 = vector.load %arg6[%c0_9, %c0_10] : memref<1x128xf32, #tpu.memory_space<vmem>>, vector<1x128xf32>
    %cst = arith.constant 0.000000e+00 : f32
    %6 = vector.broadcast %cst : f32 to vector<2x32xf32>
    %cst_11 = arith.constant 0.000000e+00 : f32
    %7 = vector.broadcast %cst_11 : f32 to vector<2x32xf32>
    %cst_12 = arith.constant 0.000000e+00 : f32
    %8 = vector.broadcast %cst_12 : f32 to vector<2x32xf32>
    %cst_13 = arith.constant 0.000000e+00 : f32
    %9 = vector.broadcast %cst_13 : f32 to vector<2x32xf32>
    %c0_14 = arith.constant 0 : index
    %c0_15 = arith.constant 0 : index
    %c0_16 = arith.constant 0 : index
    %10 = vector.load %arg0[%c0_14, %c0_15, %c0_16] : memref<12x2x8xf32, #tpu.memory_space<vmem>>, vector<1x2x8xf32>
    %11 = vector.shape_cast %10 : vector<1x2x8xf32> to vector<2x8xf32>
    %cst_17 = arith.constant dense<0.000000e+00> : vector<2x128xf32>
    %12 = tpu.matmul %11, %0, %cst_17 {dimension_numbers = #tpu.dot_dimension_numbers<[1], [0], [0], [1], [0, 0, 1, 1], [], []>} : vector<2x8xf32>, vector<8x128xf32>, vector<2x128xf32> -> vector<2x128xf32>
    %cst_18 = arith.constant dense<0.000000e+00> : vector<2x128xf32>
    %13 = tpu.matmul %6, %2, %cst_18 {dimension_numbers = #tpu.dot_dimension_numbers<[1], [0], [0], [1], [0, 0, 1, 1], [], []>} : vector<2x32xf32>, vector<32x128xf32>, vector<2x128xf32> -> vector<2x128xf32>
    %14 = arith.addf %12, %13 : vector<2x128xf32>
    %15 = vector.broadcast %4 : vector<1x128xf32> to vector<2x128xf32>
    %16 = arith.addf %14, %15 : vector<2x128xf32>
    %17 = arith.negf %16 : vector<2x128xf32>
    %18 = math.exp %17 : vector<2x128xf32>
    %cst_19 = arith.constant 1.000000e+00 : f32
    %19 = vector.broadcast %cst_19 : f32 to vector<2x128xf32>
    %20 = arith.addf %19, %18 : vector<2x128xf32>
    %21 = arith.divf %19, %20 : vector<2x128xf32>
    %22 = vector.extract_strided_slice %21 {offsets = [0, 0], sizes = [2, 32], strides = [1, 1]} : vector<2x128xf32> to vector<2x32xf32>
    %23 = vector.extract_strided_slice %21 {offsets = [0, 32], sizes = [2, 32], strides = [1, 1]} : vector<2x128xf32> to vector<2x32xf32>
    %24 = vector.extract_strided_slice %21 {offsets = [0, 96], sizes = [2, 32], strides = [1, 1]} : vector<2x128xf32> to vector<2x32xf32>
    %25 = vector.extract_strided_slice %16 {offsets = [0, 64], sizes = [2, 32], strides = [1, 1]} : vector<2x128xf32> to vector<2x32xf32>
    %26 = math.tanh %25 : vector<2x32xf32>
    %27 = arith.mulf %23, %8 : vector<2x32xf32>
    %28 = arith.mulf %22, %26 : vector<2x32xf32>
    %29 = arith.addf %27, %28 : vector<2x32xf32>
    %30 = math.tanh %29 : vector<2x32xf32>
    %31 = arith.mulf %24, %30 : vector<2x32xf32>
    %c1 = arith.constant 1 : index
    %c0_20 = arith.constant 0 : index
    %c0_21 = arith.constant 0 : index
    %32 = vector.load %arg0[%c1, %c0_20, %c0_21] : memref<12x2x8xf32, #tpu.memory_space<vmem>>, vector<1x2x8xf32>
    %33 = vector.shape_cast %32 : vector<1x2x8xf32> to vector<2x8xf32>
    %cst_22 = arith.constant dense<0.000000e+00> : vector<2x128xf32>
    %34 = tpu.matmul %33, %0, %cst_22 {dimension_numbers = #tpu.dot_dimension_numbers<[1], [0], [0], [1], [0, 0, 1, 1], [], []>} : vector<2x8xf32>, vector<8x128xf32>, vector<2x128xf32> -> vector<2x128xf32>
    %cst_23 = arith.constant dense<0.000000e+00> : vector<2x128xf32>
    %35 = tpu.matmul %31, %2, %cst_23 {dimension_numbers = #tpu.dot_dimension_numbers<[1], [0], [0], [1], [0, 0, 1, 1], [], []>} : vector<2x32xf32>, vector<32x128xf32>, vector<2x128xf32> -> vector<2x128xf32>
    %36 = arith.addf %34, %35 : vector<2x128xf32>
    %37 = vector.broadcast %4 : vector<1x128xf32> to vector<2x128xf32>
    %38 = arith.addf %36, %37 : vector<2x128xf32>
    %39 = arith.negf %38 : vector<2x128xf32>
    %40 = math.exp %39 : vector<2x128xf32>
    %cst_24 = arith.constant 1.000000e+00 : f32
    %41 = vector.broadcast %cst_24 : f32 to vector<2x128xf32>
    %42 = arith.addf %41, %40 : vector<2x128xf32>
    %43 = arith.divf %41, %42 : vector<2x128xf32>
    %44 = vector.extract_strided_slice %43 {offsets = [0, 0], sizes = [2, 32], strides = [1, 1]} : vector<2x128xf32> to vector<2x32xf32>
    %45 = vector.extract_strided_slice %43 {offsets = [0, 32], sizes = [2, 32], strides = [1, 1]} : vector<2x128xf32> to vector<2x32xf32>
    %46 = vector.extract_strided_slice %43 {offsets = [0, 96], sizes = [2, 32], strides = [1, 1]} : vector<2x128xf32> to vector<2x32xf32>
    %47 = vector.extract_strided_slice %38 {offsets = [0, 64], sizes = [2, 32], strides = [1, 1]} : vector<2x128xf32> to vector<2x32xf32>
    %48 = math.tanh %47 : vector<2x32xf32>
    %49 = arith.mulf %45, %29 : vector<2x32xf32>
    %50 = arith.mulf %44, %48 : vector<2x32xf32>
    %51 = arith.addf %49, %50 : vector<2x32xf32>
    %52 = math.tanh %51 : vector<2x32xf32>
    %53 = arith.mulf %46, %52 : vector<2x32xf32>
    %cst_25 = arith.constant dense<0.000000e+00> : vector<2x128xf32>
    %54 = tpu.matmul %31, %1, %cst_25 {dimension_numbers = #tpu.dot_dimension_numbers<[1], [0], [0], [1], [0, 0, 1, 1], [], []>} : vector<2x32xf32>, vector<32x128xf32>, vector<2x128xf32> -> vector<2x128xf32>
    %cst_26 = arith.constant dense<0.000000e+00> : vector<2x128xf32>
    %55 = tpu.matmul %7, %3, %cst_26 {dimension_numbers = #tpu.dot_dimension_numbers<[1], [0], [0], [1], [0, 0, 1, 1], [], []>} : vector<2x32xf32>, vector<32x128xf32>, vector<2x128xf32> -> vector<2x128xf32>
    %56 = arith.addf %54, %55 : vector<2x128xf32>
    %57 = vector.broadcast %5 : vector<1x128xf32> to vector<2x128xf32>
    %58 = arith.addf %56, %57 : vector<2x128xf32>
    %59 = arith.negf %58 : vector<2x128xf32>
    %60 = math.exp %59 : vector<2x128xf32>
    %cst_27 = arith.constant 1.000000e+00 : f32
    %61 = vector.broadcast %cst_27 : f32 to vector<2x128xf32>
    %62 = arith.addf %61, %60 : vector<2x128xf32>
    %63 = arith.divf %61, %62 : vector<2x128xf32>
    %64 = vector.extract_strided_slice %63 {offsets = [0, 0], sizes = [2, 32], strides = [1, 1]} : vector<2x128xf32> to vector<2x32xf32>
    %65 = vector.extract_strided_slice %63 {offsets = [0, 32], sizes = [2, 32], strides = [1, 1]} : vector<2x128xf32> to vector<2x32xf32>
    %66 = vector.extract_strided_slice %63 {offsets = [0, 96], sizes = [2, 32], strides = [1, 1]} : vector<2x128xf32> to vector<2x32xf32>
    %67 = vector.extract_strided_slice %58 {offsets = [0, 64], sizes = [2, 32], strides = [1, 1]} : vector<2x128xf32> to vector<2x32xf32>
    %68 = math.tanh %67 : vector<2x32xf32>
    %69 = arith.mulf %65, %9 : vector<2x32xf32>
    %70 = arith.mulf %64, %68 : vector<2x32xf32>
    %71 = arith.addf %69, %70 : vector<2x32xf32>
    %72 = math.tanh %71 : vector<2x32xf32>
    %73 = arith.mulf %66, %72 : vector<2x32xf32>
    %c2 = arith.constant 2 : index
    %c0_28 = arith.constant 0 : index
    %c0_29 = arith.constant 0 : index
    %74 = vector.load %arg0[%c2, %c0_28, %c0_29] : memref<12x2x8xf32, #tpu.memory_space<vmem>>, vector<1x2x8xf32>
    %75 = vector.shape_cast %74 : vector<1x2x8xf32> to vector<2x8xf32>
    %cst_30 = arith.constant dense<0.000000e+00> : vector<2x128xf32>
    %76 = tpu.matmul %75, %0, %cst_30 {dimension_numbers = #tpu.dot_dimension_numbers<[1], [0], [0], [1], [0, 0, 1, 1], [], []>} : vector<2x8xf32>, vector<8x128xf32>, vector<2x128xf32> -> vector<2x128xf32>
    %cst_31 = arith.constant dense<0.000000e+00> : vector<2x128xf32>
    %77 = tpu.matmul %53, %2, %cst_31 {dimension_numbers = #tpu.dot_dimension_numbers<[1], [0], [0], [1], [0, 0, 1, 1], [], []>} : vector<2x32xf32>, vector<32x128xf32>, vector<2x128xf32> -> vector<2x128xf32>
    %78 = arith.addf %76, %77 : vector<2x128xf32>
    %79 = vector.broadcast %4 : vector<1x128xf32> to vector<2x128xf32>
    %80 = arith.addf %78, %79 : vector<2x128xf32>
    %81 = arith.negf %80 : vector<2x128xf32>
    %82 = math.exp %81 : vector<2x128xf32>
    %cst_32 = arith.constant 1.000000e+00 : f32
    %83 = vector.broadcast %cst_32 : f32 to vector<2x128xf32>
    %84 = arith.addf %83, %82 : vector<2x128xf32>
    %85 = arith.divf %83, %84 : vector<2x128xf32>
    %86 = vector.extract_strided_slice %85 {offsets = [0, 0], sizes = [2, 32], strides = [1, 1]} : vector<2x128xf32> to vector<2x32xf32>
    %87 = vector.extract_strided_slice %85 {offsets = [0, 32], sizes = [2, 32], strides = [1, 1]} : vector<2x128xf32> to vector<2x32xf32>
    %88 = vector.extract_strided_slice %85 {offsets = [0, 96], sizes = [2, 32], strides = [1, 1]} : vector<2x128xf32> to vector<2x32xf32>
    %89 = vector.extract_strided_slice %80 {offsets = [0, 64], sizes = [2, 32], strides = [1, 1]} : vector<2x128xf32> to vector<2x32xf32>
    %90 = math.tanh %89 : vector<2x32xf32>
    %91 = arith.mulf %87, %51 : vector<2x32xf32>
    %92 = arith.mulf %86, %90 : vector<2x32xf32>
    %93 = arith.addf %91, %92 : vector<2x32xf32>
    %94 = math.tanh %93 : vector<2x32xf32>
    %95 = arith.mulf %88, %94 : vector<2x32xf32>
    %cst_33 = arith.constant dense<0.000000e+00> : vector<2x128xf32>
    %96 = tpu.matmul %53, %1, %cst_33 {dimension_numbers = #tpu.dot_dimension_numbers<[1], [0], [0], [1], [0, 0, 1, 1], [], []>} : vector<2x32xf32>, vector<32x128xf32>, vector<2x128xf32> -> vector<2x128xf32>
    %cst_34 = arith.constant dense<0.000000e+00> : vector<2x128xf32>
    %97 = tpu.matmul %73, %3, %cst_34 {dimension_numbers = #tpu.dot_dimension_numbers<[1], [0], [0], [1], [0, 0, 1, 1], [], []>} : vector<2x32xf32>, vector<32x128xf32>, vector<2x128xf32> -> vector<2x128xf32>
    %98 = arith.addf %96, %97 : vector<2x128xf32>
    %99 = vector.broadcast %5 : vector<1x128xf32> to vector<2x128xf32>
    %100 = arith.addf %98, %99 : vector<2x128xf32>
    %101 = arith.negf %100 : vector<2x128xf32>
    %102 = math.exp %101 : vector<2x128xf32>
    %cst_35 = arith.constant 1.000000e+00 : f32
    %103 = vector.broadcast %cst_35 : f32 to vector<2x128xf32>
    %104 = arith.addf %103, %102 : vector<2x128xf32>
    %105 = arith.divf %103, %104 : vector<2x128xf32>
    %106 = vector.extract_strided_slice %105 {offsets = [0, 0], sizes = [2, 32], strides = [1, 1]} : vector<2x128xf32> to vector<2x32xf32>
    %107 = vector.extract_strided_slice %105 {offsets = [0, 32], sizes = [2, 32], strides = [1, 1]} : vector<2x128xf32> to vector<2x32xf32>
    %108 = vector.extract_strided_slice %105 {offsets = [0, 96], sizes = [2, 32], strides = [1, 1]} : vector<2x128xf32> to vector<2x32xf32>
    %109 = vector.extract_strided_slice %100 {offsets = [0, 64], sizes = [2, 32], strides = [1, 1]} : vector<2x128xf32> to vector<2x32xf32>
    %110 = math.tanh %109 : vector<2x32xf32>
    %111 = arith.mulf %107, %71 : vector<2x32xf32>
    %112 = arith.mulf %106, %110 : vector<2x32xf32>
    %113 = arith.addf %111, %112 : vector<2x32xf32>
    %114 = math.tanh %113 : vector<2x32xf32>
    %115 = arith.mulf %108, %114 : vector<2x32xf32>
    %c3 = arith.constant 3 : index
    %c0_36 = arith.constant 0 : index
    %c0_37 = arith.constant 0 : index
    %116 = vector.load %arg0[%c3, %c0_36, %c0_37] : memref<12x2x8xf32, #tpu.memory_space<vmem>>, vector<1x2x8xf32>
    %117 = vector.shape_cast %116 : vector<1x2x8xf32> to vector<2x8xf32>
    %cst_38 = arith.constant dense<0.000000e+00> : vector<2x128xf32>
    %118 = tpu.matmul %117, %0, %cst_38 {dimension_numbers = #tpu.dot_dimension_numbers<[1], [0], [0], [1], [0, 0, 1, 1], [], []>} : vector<2x8xf32>, vector<8x128xf32>, vector<2x128xf32> -> vector<2x128xf32>
    %cst_39 = arith.constant dense<0.000000e+00> : vector<2x128xf32>
    %119 = tpu.matmul %95, %2, %cst_39 {dimension_numbers = #tpu.dot_dimension_numbers<[1], [0], [0], [1], [0, 0, 1, 1], [], []>} : vector<2x32xf32>, vector<32x128xf32>, vector<2x128xf32> -> vector<2x128xf32>
    %120 = arith.addf %118, %119 : vector<2x128xf32>
    %121 = vector.broadcast %4 : vector<1x128xf32> to vector<2x128xf32>
    %122 = arith.addf %120, %121 : vector<2x128xf32>
    %123 = arith.negf %122 : vector<2x128xf32>
    %124 = math.exp %123 : vector<2x128xf32>
    %cst_40 = arith.constant 1.000000e+00 : f32
    %125 = vector.broadcast %cst_40 : f32 to vector<2x128xf32>
    %126 = arith.addf %125, %124 : vector<2x128xf32>
    %127 = arith.divf %125, %126 : vector<2x128xf32>
    %128 = vector.extract_strided_slice %127 {offsets = [0, 0], sizes = [2, 32], strides = [1, 1]} : vector<2x128xf32> to vector<2x32xf32>
    %129 = vector.extract_strided_slice %127 {offsets = [0, 32], sizes = [2, 32], strides = [1, 1]} : vector<2x128xf32> to vector<2x32xf32>
    %130 = vector.extract_strided_slice %127 {offsets = [0, 96], sizes = [2, 32], strides = [1, 1]} : vector<2x128xf32> to vector<2x32xf32>
    %131 = vector.extract_strided_slice %122 {offsets = [0, 64], sizes = [2, 32], strides = [1, 1]} : vector<2x128xf32> to vector<2x32xf32>
    %132 = math.tanh %131 : vector<2x32xf32>
    %133 = arith.mulf %129, %93 : vector<2x32xf32>
    %134 = arith.mulf %128, %132 : vector<2x32xf32>
    %135 = arith.addf %133, %134 : vector<2x32xf32>
    %136 = math.tanh %135 : vector<2x32xf32>
    %137 = arith.mulf %130, %136 : vector<2x32xf32>
    %cst_41 = arith.constant dense<0.000000e+00> : vector<2x128xf32>
    %138 = tpu.matmul %95, %1, %cst_41 {dimension_numbers = #tpu.dot_dimension_numbers<[1], [0], [0], [1], [0, 0, 1, 1], [], []>} : vector<2x32xf32>, vector<32x128xf32>, vector<2x128xf32> -> vector<2x128xf32>
    %cst_42 = arith.constant dense<0.000000e+00> : vector<2x128xf32>
    %139 = tpu.matmul %115, %3, %cst_42 {dimension_numbers = #tpu.dot_dimension_numbers<[1], [0], [0], [1], [0, 0, 1, 1], [], []>} : vector<2x32xf32>, vector<32x128xf32>, vector<2x128xf32> -> vector<2x128xf32>
    %140 = arith.addf %138, %139 : vector<2x128xf32>
    %141 = vector.broadcast %5 : vector<1x128xf32> to vector<2x128xf32>
    %142 = arith.addf %140, %141 : vector<2x128xf32>
    %143 = arith.negf %142 : vector<2x128xf32>
    %144 = math.exp %143 : vector<2x128xf32>
    %cst_43 = arith.constant 1.000000e+00 : f32
    %145 = vector.broadcast %cst_43 : f32 to vector<2x128xf32>
    %146 = arith.addf %145, %144 : vector<2x128xf32>
    %147 = arith.divf %145, %146 : vector<2x128xf32>
    %148 = vector.extract_strided_slice %147 {offsets = [0, 0], sizes = [2, 32], strides = [1, 1]} : vector<2x128xf32> to vector<2x32xf32>
    %149 = vector.extract_strided_slice %147 {offsets = [0, 32], sizes = [2, 32], strides = [1, 1]} : vector<2x128xf32> to vector<2x32xf32>
    %150 = vector.extract_strided_slice %147 {offsets = [0, 96], sizes = [2, 32], strides = [1, 1]} : vector<2x128xf32> to vector<2x32xf32>
    %151 = vector.extract_strided_slice %142 {offsets = [0, 64], sizes = [2, 32], strides = [1, 1]} : vector<2x128xf32> to vector<2x32xf32>
    %152 = math.tanh %151 : vector<2x32xf32>
    %153 = arith.mulf %149, %113 : vector<2x32xf32>
    %154 = arith.mulf %148, %152 : vector<2x32xf32>
    %155 = arith.addf %153, %154 : vector<2x32xf32>
    %156 = math.tanh %155 : vector<2x32xf32>
    %157 = arith.mulf %150, %156 : vector<2x32xf32>
    %c4 = arith.constant 4 : index
    %c0_44 = arith.constant 0 : index
    %c0_45 = arith.constant 0 : index
    %158 = vector.load %arg0[%c4, %c0_44, %c0_45] : memref<12x2x8xf32, #tpu.memory_space<vmem>>, vector<1x2x8xf32>
    %159 = vector.shape_cast %158 : vector<1x2x8xf32> to vector<2x8xf32>
    %cst_46 = arith.constant dense<0.000000e+00> : vector<2x128xf32>
    %160 = tpu.matmul %159, %0, %cst_46 {dimension_numbers = #tpu.dot_dimension_numbers<[1], [0], [0], [1], [0, 0, 1, 1], [], []>} : vector<2x8xf32>, vector<8x128xf32>, vector<2x128xf32> -> vector<2x128xf32>
    %cst_47 = arith.constant dense<0.000000e+00> : vector<2x128xf32>
    %161 = tpu.matmul %137, %2, %cst_47 {dimension_numbers = #tpu.dot_dimension_numbers<[1], [0], [0], [1], [0, 0, 1, 1], [], []>} : vector<2x32xf32>, vector<32x128xf32>, vector<2x128xf32> -> vector<2x128xf32>
    %162 = arith.addf %160, %161 : vector<2x128xf32>
    %163 = vector.broadcast %4 : vector<1x128xf32> to vector<2x128xf32>
    %164 = arith.addf %162, %163 : vector<2x128xf32>
    %165 = arith.negf %164 : vector<2x128xf32>
    %166 = math.exp %165 : vector<2x128xf32>
    %cst_48 = arith.constant 1.000000e+00 : f32
    %167 = vector.broadcast %cst_48 : f32 to vector<2x128xf32>
    %168 = arith.addf %167, %166 : vector<2x128xf32>
    %169 = arith.divf %167, %168 : vector<2x128xf32>
    %170 = vector.extract_strided_slice %169 {offsets = [0, 0], sizes = [2, 32], strides = [1, 1]} : vector<2x128xf32> to vector<2x32xf32>
    %171 = vector.extract_strided_slice %169 {offsets = [0, 32], sizes = [2, 32], strides = [1, 1]} : vector<2x128xf32> to vector<2x32xf32>
    %172 = vector.extract_strided_slice %169 {offsets = [0, 96], sizes = [2, 32], strides = [1, 1]} : vector<2x128xf32> to vector<2x32xf32>
    %173 = vector.extract_strided_slice %164 {offsets = [0, 64], sizes = [2, 32], strides = [1, 1]} : vector<2x128xf32> to vector<2x32xf32>
    %174 = math.tanh %173 : vector<2x32xf32>
    %175 = arith.mulf %171, %135 : vector<2x32xf32>
    %176 = arith.mulf %170, %174 : vector<2x32xf32>
    %177 = arith.addf %175, %176 : vector<2x32xf32>
    %178 = math.tanh %177 : vector<2x32xf32>
    %179 = arith.mulf %172, %178 : vector<2x32xf32>
    %cst_49 = arith.constant dense<0.000000e+00> : vector<2x128xf32>
    %180 = tpu.matmul %137, %1, %cst_49 {dimension_numbers = #tpu.dot_dimension_numbers<[1], [0], [0], [1], [0, 0, 1, 1], [], []>} : vector<2x32xf32>, vector<32x128xf32>, vector<2x128xf32> -> vector<2x128xf32>
    %cst_50 = arith.constant dense<0.000000e+00> : vector<2x128xf32>
    %181 = tpu.matmul %157, %3, %cst_50 {dimension_numbers = #tpu.dot_dimension_numbers<[1], [0], [0], [1], [0, 0, 1, 1], [], []>} : vector<2x32xf32>, vector<32x128xf32>, vector<2x128xf32> -> vector<2x128xf32>
    %182 = arith.addf %180, %181 : vector<2x128xf32>
    %183 = vector.broadcast %5 : vector<1x128xf32> to vector<2x128xf32>
    %184 = arith.addf %182, %183 : vector<2x128xf32>
    %185 = arith.negf %184 : vector<2x128xf32>
    %186 = math.exp %185 : vector<2x128xf32>
    %cst_51 = arith.constant 1.000000e+00 : f32
    %187 = vector.broadcast %cst_51 : f32 to vector<2x128xf32>
    %188 = arith.addf %187, %186 : vector<2x128xf32>
    %189 = arith.divf %187, %188 : vector<2x128xf32>
    %190 = vector.extract_strided_slice %189 {offsets = [0, 0], sizes = [2, 32], strides = [1, 1]} : vector<2x128xf32> to vector<2x32xf32>
    %191 = vector.extract_strided_slice %189 {offsets = [0, 32], sizes = [2, 32], strides = [1, 1]} : vector<2x128xf32> to vector<2x32xf32>
    %192 = vector.extract_strided_slice %189 {offsets = [0, 96], sizes = [2, 32], strides = [1, 1]} : vector<2x128xf32> to vector<2x32xf32>
    %193 = vector.extract_strided_slice %184 {offsets = [0, 64], sizes = [2, 32], strides = [1, 1]} : vector<2x128xf32> to vector<2x32xf32>
    %194 = math.tanh %193 : vector<2x32xf32>
    %195 = arith.mulf %191, %155 : vector<2x32xf32>
    %196 = arith.mulf %190, %194 : vector<2x32xf32>
    %197 = arith.addf %195, %196 : vector<2x32xf32>
    %198 = math.tanh %197 : vector<2x32xf32>
    %199 = arith.mulf %192, %198 : vector<2x32xf32>
    %c5 = arith.constant 5 : index
    %c0_52 = arith.constant 0 : index
    %c0_53 = arith.constant 0 : index
    %200 = vector.load %arg0[%c5, %c0_52, %c0_53] : memref<12x2x8xf32, #tpu.memory_space<vmem>>, vector<1x2x8xf32>
    %201 = vector.shape_cast %200 : vector<1x2x8xf32> to vector<2x8xf32>
    %cst_54 = arith.constant dense<0.000000e+00> : vector<2x128xf32>
    %202 = tpu.matmul %201, %0, %cst_54 {dimension_numbers = #tpu.dot_dimension_numbers<[1], [0], [0], [1], [0, 0, 1, 1], [], []>} : vector<2x8xf32>, vector<8x128xf32>, vector<2x128xf32> -> vector<2x128xf32>
    %cst_55 = arith.constant dense<0.000000e+00> : vector<2x128xf32>
    %203 = tpu.matmul %179, %2, %cst_55 {dimension_numbers = #tpu.dot_dimension_numbers<[1], [0], [0], [1], [0, 0, 1, 1], [], []>} : vector<2x32xf32>, vector<32x128xf32>, vector<2x128xf32> -> vector<2x128xf32>
    %204 = arith.addf %202, %203 : vector<2x128xf32>
    %205 = vector.broadcast %4 : vector<1x128xf32> to vector<2x128xf32>
    %206 = arith.addf %204, %205 : vector<2x128xf32>
    %207 = arith.negf %206 : vector<2x128xf32>
    %208 = math.exp %207 : vector<2x128xf32>
    %cst_56 = arith.constant 1.000000e+00 : f32
    %209 = vector.broadcast %cst_56 : f32 to vector<2x128xf32>
    %210 = arith.addf %209, %208 : vector<2x128xf32>
    %211 = arith.divf %209, %210 : vector<2x128xf32>
    %212 = vector.extract_strided_slice %211 {offsets = [0, 0], sizes = [2, 32], strides = [1, 1]} : vector<2x128xf32> to vector<2x32xf32>
    %213 = vector.extract_strided_slice %211 {offsets = [0, 32], sizes = [2, 32], strides = [1, 1]} : vector<2x128xf32> to vector<2x32xf32>
    %214 = vector.extract_strided_slice %211 {offsets = [0, 96], sizes = [2, 32], strides = [1, 1]} : vector<2x128xf32> to vector<2x32xf32>
    %215 = vector.extract_strided_slice %206 {offsets = [0, 64], sizes = [2, 32], strides = [1, 1]} : vector<2x128xf32> to vector<2x32xf32>
    %216 = math.tanh %215 : vector<2x32xf32>
    %217 = arith.mulf %213, %177 : vector<2x32xf32>
    %218 = arith.mulf %212, %216 : vector<2x32xf32>
    %219 = arith.addf %217, %218 : vector<2x32xf32>
    %220 = math.tanh %219 : vector<2x32xf32>
    %221 = arith.mulf %214, %220 : vector<2x32xf32>
    %cst_57 = arith.constant dense<0.000000e+00> : vector<2x128xf32>
    %222 = tpu.matmul %179, %1, %cst_57 {dimension_numbers = #tpu.dot_dimension_numbers<[1], [0], [0], [1], [0, 0, 1, 1], [], []>} : vector<2x32xf32>, vector<32x128xf32>, vector<2x128xf32> -> vector<2x128xf32>
    %cst_58 = arith.constant dense<0.000000e+00> : vector<2x128xf32>
    %223 = tpu.matmul %199, %3, %cst_58 {dimension_numbers = #tpu.dot_dimension_numbers<[1], [0], [0], [1], [0, 0, 1, 1], [], []>} : vector<2x32xf32>, vector<32x128xf32>, vector<2x128xf32> -> vector<2x128xf32>
    %224 = arith.addf %222, %223 : vector<2x128xf32>
    %225 = vector.broadcast %5 : vector<1x128xf32> to vector<2x128xf32>
    %226 = arith.addf %224, %225 : vector<2x128xf32>
    %227 = arith.negf %226 : vector<2x128xf32>
    %228 = math.exp %227 : vector<2x128xf32>
    %cst_59 = arith.constant 1.000000e+00 : f32
    %229 = vector.broadcast %cst_59 : f32 to vector<2x128xf32>
    %230 = arith.addf %229, %228 : vector<2x128xf32>
    %231 = arith.divf %229, %230 : vector<2x128xf32>
    %232 = vector.extract_strided_slice %231 {offsets = [0, 0], sizes = [2, 32], strides = [1, 1]} : vector<2x128xf32> to vector<2x32xf32>
    %233 = vector.extract_strided_slice %231 {offsets = [0, 32], sizes = [2, 32], strides = [1, 1]} : vector<2x128xf32> to vector<2x32xf32>
    %234 = vector.extract_strided_slice %231 {offsets = [0, 96], sizes = [2, 32], strides = [1, 1]} : vector<2x128xf32> to vector<2x32xf32>
    %235 = vector.extract_strided_slice %226 {offsets = [0, 64], sizes = [2, 32], strides = [1, 1]} : vector<2x128xf32> to vector<2x32xf32>
    %236 = math.tanh %235 : vector<2x32xf32>
    %237 = arith.mulf %233, %197 : vector<2x32xf32>
    %238 = arith.mulf %232, %236 : vector<2x32xf32>
    %239 = arith.addf %237, %238 : vector<2x32xf32>
    %240 = math.tanh %239 : vector<2x32xf32>
    %241 = arith.mulf %234, %240 : vector<2x32xf32>
    %c6 = arith.constant 6 : index
    %c0_60 = arith.constant 0 : index
    %c0_61 = arith.constant 0 : index
    %242 = vector.load %arg0[%c6, %c0_60, %c0_61] : memref<12x2x8xf32, #tpu.memory_space<vmem>>, vector<1x2x8xf32>
    %243 = vector.shape_cast %242 : vector<1x2x8xf32> to vector<2x8xf32>
    %cst_62 = arith.constant dense<0.000000e+00> : vector<2x128xf32>
    %244 = tpu.matmul %243, %0, %cst_62 {dimension_numbers = #tpu.dot_dimension_numbers<[1], [0], [0], [1], [0, 0, 1, 1], [], []>} : vector<2x8xf32>, vector<8x128xf32>, vector<2x128xf32> -> vector<2x128xf32>
    %cst_63 = arith.constant dense<0.000000e+00> : vector<2x128xf32>
    %245 = tpu.matmul %221, %2, %cst_63 {dimension_numbers = #tpu.dot_dimension_numbers<[1], [0], [0], [1], [0, 0, 1, 1], [], []>} : vector<2x32xf32>, vector<32x128xf32>, vector<2x128xf32> -> vector<2x128xf32>
    %246 = arith.addf %244, %245 : vector<2x128xf32>
    %247 = vector.broadcast %4 : vector<1x128xf32> to vector<2x128xf32>
    %248 = arith.addf %246, %247 : vector<2x128xf32>
    %249 = arith.negf %248 : vector<2x128xf32>
    %250 = math.exp %249 : vector<2x128xf32>
    %cst_64 = arith.constant 1.000000e+00 : f32
    %251 = vector.broadcast %cst_64 : f32 to vector<2x128xf32>
    %252 = arith.addf %251, %250 : vector<2x128xf32>
    %253 = arith.divf %251, %252 : vector<2x128xf32>
    %254 = vector.extract_strided_slice %253 {offsets = [0, 0], sizes = [2, 32], strides = [1, 1]} : vector<2x128xf32> to vector<2x32xf32>
    %255 = vector.extract_strided_slice %253 {offsets = [0, 32], sizes = [2, 32], strides = [1, 1]} : vector<2x128xf32> to vector<2x32xf32>
    %256 = vector.extract_strided_slice %253 {offsets = [0, 96], sizes = [2, 32], strides = [1, 1]} : vector<2x128xf32> to vector<2x32xf32>
    %257 = vector.extract_strided_slice %248 {offsets = [0, 64], sizes = [2, 32], strides = [1, 1]} : vector<2x128xf32> to vector<2x32xf32>
    %258 = math.tanh %257 : vector<2x32xf32>
    %259 = arith.mulf %255, %219 : vector<2x32xf32>
    %260 = arith.mulf %254, %258 : vector<2x32xf32>
    %261 = arith.addf %259, %260 : vector<2x32xf32>
    %262 = math.tanh %261 : vector<2x32xf32>
    %263 = arith.mulf %256, %262 : vector<2x32xf32>
    %cst_65 = arith.constant dense<0.000000e+00> : vector<2x128xf32>
    %264 = tpu.matmul %221, %1, %cst_65 {dimension_numbers = #tpu.dot_dimension_numbers<[1], [0], [0], [1], [0, 0, 1, 1], [], []>} : vector<2x32xf32>, vector<32x128xf32>, vector<2x128xf32> -> vector<2x128xf32>
    %cst_66 = arith.constant dense<0.000000e+00> : vector<2x128xf32>
    %265 = tpu.matmul %241, %3, %cst_66 {dimension_numbers = #tpu.dot_dimension_numbers<[1], [0], [0], [1], [0, 0, 1, 1], [], []>} : vector<2x32xf32>, vector<32x128xf32>, vector<2x128xf32> -> vector<2x128xf32>
    %266 = arith.addf %264, %265 : vector<2x128xf32>
    %267 = vector.broadcast %5 : vector<1x128xf32> to vector<2x128xf32>
    %268 = arith.addf %266, %267 : vector<2x128xf32>
    %269 = arith.negf %268 : vector<2x128xf32>
    %270 = math.exp %269 : vector<2x128xf32>
    %cst_67 = arith.constant 1.000000e+00 : f32
    %271 = vector.broadcast %cst_67 : f32 to vector<2x128xf32>
    %272 = arith.addf %271, %270 : vector<2x128xf32>
    %273 = arith.divf %271, %272 : vector<2x128xf32>
    %274 = vector.extract_strided_slice %273 {offsets = [0, 0], sizes = [2, 32], strides = [1, 1]} : vector<2x128xf32> to vector<2x32xf32>
    %275 = vector.extract_strided_slice %273 {offsets = [0, 32], sizes = [2, 32], strides = [1, 1]} : vector<2x128xf32> to vector<2x32xf32>
    %276 = vector.extract_strided_slice %273 {offsets = [0, 96], sizes = [2, 32], strides = [1, 1]} : vector<2x128xf32> to vector<2x32xf32>
    %277 = vector.extract_strided_slice %268 {offsets = [0, 64], sizes = [2, 32], strides = [1, 1]} : vector<2x128xf32> to vector<2x32xf32>
    %278 = math.tanh %277 : vector<2x32xf32>
    %279 = arith.mulf %275, %239 : vector<2x32xf32>
    %280 = arith.mulf %274, %278 : vector<2x32xf32>
    %281 = arith.addf %279, %280 : vector<2x32xf32>
    %282 = math.tanh %281 : vector<2x32xf32>
    %283 = arith.mulf %276, %282 : vector<2x32xf32>
    %c7 = arith.constant 7 : index
    %c0_68 = arith.constant 0 : index
    %c0_69 = arith.constant 0 : index
    %284 = vector.load %arg0[%c7, %c0_68, %c0_69] : memref<12x2x8xf32, #tpu.memory_space<vmem>>, vector<1x2x8xf32>
    %285 = vector.shape_cast %284 : vector<1x2x8xf32> to vector<2x8xf32>
    %cst_70 = arith.constant dense<0.000000e+00> : vector<2x128xf32>
    %286 = tpu.matmul %285, %0, %cst_70 {dimension_numbers = #tpu.dot_dimension_numbers<[1], [0], [0], [1], [0, 0, 1, 1], [], []>} : vector<2x8xf32>, vector<8x128xf32>, vector<2x128xf32> -> vector<2x128xf32>
    %cst_71 = arith.constant dense<0.000000e+00> : vector<2x128xf32>
    %287 = tpu.matmul %263, %2, %cst_71 {dimension_numbers = #tpu.dot_dimension_numbers<[1], [0], [0], [1], [0, 0, 1, 1], [], []>} : vector<2x32xf32>, vector<32x128xf32>, vector<2x128xf32> -> vector<2x128xf32>
    %288 = arith.addf %286, %287 : vector<2x128xf32>
    %289 = vector.broadcast %4 : vector<1x128xf32> to vector<2x128xf32>
    %290 = arith.addf %288, %289 : vector<2x128xf32>
    %291 = arith.negf %290 : vector<2x128xf32>
    %292 = math.exp %291 : vector<2x128xf32>
    %cst_72 = arith.constant 1.000000e+00 : f32
    %293 = vector.broadcast %cst_72 : f32 to vector<2x128xf32>
    %294 = arith.addf %293, %292 : vector<2x128xf32>
    %295 = arith.divf %293, %294 : vector<2x128xf32>
    %296 = vector.extract_strided_slice %295 {offsets = [0, 0], sizes = [2, 32], strides = [1, 1]} : vector<2x128xf32> to vector<2x32xf32>
    %297 = vector.extract_strided_slice %295 {offsets = [0, 32], sizes = [2, 32], strides = [1, 1]} : vector<2x128xf32> to vector<2x32xf32>
    %298 = vector.extract_strided_slice %295 {offsets = [0, 96], sizes = [2, 32], strides = [1, 1]} : vector<2x128xf32> to vector<2x32xf32>
    %299 = vector.extract_strided_slice %290 {offsets = [0, 64], sizes = [2, 32], strides = [1, 1]} : vector<2x128xf32> to vector<2x32xf32>
    %300 = math.tanh %299 : vector<2x32xf32>
    %301 = arith.mulf %297, %261 : vector<2x32xf32>
    %302 = arith.mulf %296, %300 : vector<2x32xf32>
    %303 = arith.addf %301, %302 : vector<2x32xf32>
    %304 = math.tanh %303 : vector<2x32xf32>
    %305 = arith.mulf %298, %304 : vector<2x32xf32>
    %cst_73 = arith.constant dense<0.000000e+00> : vector<2x128xf32>
    %306 = tpu.matmul %263, %1, %cst_73 {dimension_numbers = #tpu.dot_dimension_numbers<[1], [0], [0], [1], [0, 0, 1, 1], [], []>} : vector<2x32xf32>, vector<32x128xf32>, vector<2x128xf32> -> vector<2x128xf32>
    %cst_74 = arith.constant dense<0.000000e+00> : vector<2x128xf32>
    %307 = tpu.matmul %283, %3, %cst_74 {dimension_numbers = #tpu.dot_dimension_numbers<[1], [0], [0], [1], [0, 0, 1, 1], [], []>} : vector<2x32xf32>, vector<32x128xf32>, vector<2x128xf32> -> vector<2x128xf32>
    %308 = arith.addf %306, %307 : vector<2x128xf32>
    %309 = vector.broadcast %5 : vector<1x128xf32> to vector<2x128xf32>
    %310 = arith.addf %308, %309 : vector<2x128xf32>
    %311 = arith.negf %310 : vector<2x128xf32>
    %312 = math.exp %311 : vector<2x128xf32>
    %cst_75 = arith.constant 1.000000e+00 : f32
    %313 = vector.broadcast %cst_75 : f32 to vector<2x128xf32>
    %314 = arith.addf %313, %312 : vector<2x128xf32>
    %315 = arith.divf %313, %314 : vector<2x128xf32>
    %316 = vector.extract_strided_slice %315 {offsets = [0, 0], sizes = [2, 32], strides = [1, 1]} : vector<2x128xf32> to vector<2x32xf32>
    %317 = vector.extract_strided_slice %315 {offsets = [0, 32], sizes = [2, 32], strides = [1, 1]} : vector<2x128xf32> to vector<2x32xf32>
    %318 = vector.extract_strided_slice %315 {offsets = [0, 96], sizes = [2, 32], strides = [1, 1]} : vector<2x128xf32> to vector<2x32xf32>
    %319 = vector.extract_strided_slice %310 {offsets = [0, 64], sizes = [2, 32], strides = [1, 1]} : vector<2x128xf32> to vector<2x32xf32>
    %320 = math.tanh %319 : vector<2x32xf32>
    %321 = arith.mulf %317, %281 : vector<2x32xf32>
    %322 = arith.mulf %316, %320 : vector<2x32xf32>
    %323 = arith.addf %321, %322 : vector<2x32xf32>
    %324 = math.tanh %323 : vector<2x32xf32>
    %325 = arith.mulf %318, %324 : vector<2x32xf32>
    %c8 = arith.constant 8 : index
    %c0_76 = arith.constant 0 : index
    %c0_77 = arith.constant 0 : index
    %326 = vector.load %arg0[%c8, %c0_76, %c0_77] : memref<12x2x8xf32, #tpu.memory_space<vmem>>, vector<1x2x8xf32>
    %327 = vector.shape_cast %326 : vector<1x2x8xf32> to vector<2x8xf32>
    %cst_78 = arith.constant dense<0.000000e+00> : vector<2x128xf32>
    %328 = tpu.matmul %327, %0, %cst_78 {dimension_numbers = #tpu.dot_dimension_numbers<[1], [0], [0], [1], [0, 0, 1, 1], [], []>} : vector<2x8xf32>, vector<8x128xf32>, vector<2x128xf32> -> vector<2x128xf32>
    %cst_79 = arith.constant dense<0.000000e+00> : vector<2x128xf32>
    %329 = tpu.matmul %305, %2, %cst_79 {dimension_numbers = #tpu.dot_dimension_numbers<[1], [0], [0], [1], [0, 0, 1, 1], [], []>} : vector<2x32xf32>, vector<32x128xf32>, vector<2x128xf32> -> vector<2x128xf32>
    %330 = arith.addf %328, %329 : vector<2x128xf32>
    %331 = vector.broadcast %4 : vector<1x128xf32> to vector<2x128xf32>
    %332 = arith.addf %330, %331 : vector<2x128xf32>
    %333 = arith.negf %332 : vector<2x128xf32>
    %334 = math.exp %333 : vector<2x128xf32>
    %cst_80 = arith.constant 1.000000e+00 : f32
    %335 = vector.broadcast %cst_80 : f32 to vector<2x128xf32>
    %336 = arith.addf %335, %334 : vector<2x128xf32>
    %337 = arith.divf %335, %336 : vector<2x128xf32>
    %338 = vector.extract_strided_slice %337 {offsets = [0, 0], sizes = [2, 32], strides = [1, 1]} : vector<2x128xf32> to vector<2x32xf32>
    %339 = vector.extract_strided_slice %337 {offsets = [0, 32], sizes = [2, 32], strides = [1, 1]} : vector<2x128xf32> to vector<2x32xf32>
    %340 = vector.extract_strided_slice %337 {offsets = [0, 96], sizes = [2, 32], strides = [1, 1]} : vector<2x128xf32> to vector<2x32xf32>
    %341 = vector.extract_strided_slice %332 {offsets = [0, 64], sizes = [2, 32], strides = [1, 1]} : vector<2x128xf32> to vector<2x32xf32>
    %342 = math.tanh %341 : vector<2x32xf32>
    %343 = arith.mulf %339, %303 : vector<2x32xf32>
    %344 = arith.mulf %338, %342 : vector<2x32xf32>
    %345 = arith.addf %343, %344 : vector<2x32xf32>
    %346 = math.tanh %345 : vector<2x32xf32>
    %347 = arith.mulf %340, %346 : vector<2x32xf32>
    %cst_81 = arith.constant dense<0.000000e+00> : vector<2x128xf32>
    %348 = tpu.matmul %305, %1, %cst_81 {dimension_numbers = #tpu.dot_dimension_numbers<[1], [0], [0], [1], [0, 0, 1, 1], [], []>} : vector<2x32xf32>, vector<32x128xf32>, vector<2x128xf32> -> vector<2x128xf32>
    %cst_82 = arith.constant dense<0.000000e+00> : vector<2x128xf32>
    %349 = tpu.matmul %325, %3, %cst_82 {dimension_numbers = #tpu.dot_dimension_numbers<[1], [0], [0], [1], [0, 0, 1, 1], [], []>} : vector<2x32xf32>, vector<32x128xf32>, vector<2x128xf32> -> vector<2x128xf32>
    %350 = arith.addf %348, %349 : vector<2x128xf32>
    %351 = vector.broadcast %5 : vector<1x128xf32> to vector<2x128xf32>
    %352 = arith.addf %350, %351 : vector<2x128xf32>
    %353 = arith.negf %352 : vector<2x128xf32>
    %354 = math.exp %353 : vector<2x128xf32>
    %cst_83 = arith.constant 1.000000e+00 : f32
    %355 = vector.broadcast %cst_83 : f32 to vector<2x128xf32>
    %356 = arith.addf %355, %354 : vector<2x128xf32>
    %357 = arith.divf %355, %356 : vector<2x128xf32>
    %358 = vector.extract_strided_slice %357 {offsets = [0, 0], sizes = [2, 32], strides = [1, 1]} : vector<2x128xf32> to vector<2x32xf32>
    %359 = vector.extract_strided_slice %357 {offsets = [0, 32], sizes = [2, 32], strides = [1, 1]} : vector<2x128xf32> to vector<2x32xf32>
    %360 = vector.extract_strided_slice %357 {offsets = [0, 96], sizes = [2, 32], strides = [1, 1]} : vector<2x128xf32> to vector<2x32xf32>
    %361 = vector.extract_strided_slice %352 {offsets = [0, 64], sizes = [2, 32], strides = [1, 1]} : vector<2x128xf32> to vector<2x32xf32>
    %362 = math.tanh %361 : vector<2x32xf32>
    %363 = arith.mulf %359, %323 : vector<2x32xf32>
    %364 = arith.mulf %358, %362 : vector<2x32xf32>
    %365 = arith.addf %363, %364 : vector<2x32xf32>
    %366 = math.tanh %365 : vector<2x32xf32>
    %367 = arith.mulf %360, %366 : vector<2x32xf32>
    %c9 = arith.constant 9 : index
    %c0_84 = arith.constant 0 : index
    %c0_85 = arith.constant 0 : index
    %368 = vector.load %arg0[%c9, %c0_84, %c0_85] : memref<12x2x8xf32, #tpu.memory_space<vmem>>, vector<1x2x8xf32>
    %369 = vector.shape_cast %368 : vector<1x2x8xf32> to vector<2x8xf32>
    %cst_86 = arith.constant dense<0.000000e+00> : vector<2x128xf32>
    %370 = tpu.matmul %369, %0, %cst_86 {dimension_numbers = #tpu.dot_dimension_numbers<[1], [0], [0], [1], [0, 0, 1, 1], [], []>} : vector<2x8xf32>, vector<8x128xf32>, vector<2x128xf32> -> vector<2x128xf32>
    %cst_87 = arith.constant dense<0.000000e+00> : vector<2x128xf32>
    %371 = tpu.matmul %347, %2, %cst_87 {dimension_numbers = #tpu.dot_dimension_numbers<[1], [0], [0], [1], [0, 0, 1, 1], [], []>} : vector<2x32xf32>, vector<32x128xf32>, vector<2x128xf32> -> vector<2x128xf32>
    %372 = arith.addf %370, %371 : vector<2x128xf32>
    %373 = vector.broadcast %4 : vector<1x128xf32> to vector<2x128xf32>
    %374 = arith.addf %372, %373 : vector<2x128xf32>
    %375 = arith.negf %374 : vector<2x128xf32>
    %376 = math.exp %375 : vector<2x128xf32>
    %cst_88 = arith.constant 1.000000e+00 : f32
    %377 = vector.broadcast %cst_88 : f32 to vector<2x128xf32>
    %378 = arith.addf %377, %376 : vector<2x128xf32>
    %379 = arith.divf %377, %378 : vector<2x128xf32>
    %380 = vector.extract_strided_slice %379 {offsets = [0, 0], sizes = [2, 32], strides = [1, 1]} : vector<2x128xf32> to vector<2x32xf32>
    %381 = vector.extract_strided_slice %379 {offsets = [0, 32], sizes = [2, 32], strides = [1, 1]} : vector<2x128xf32> to vector<2x32xf32>
    %382 = vector.extract_strided_slice %379 {offsets = [0, 96], sizes = [2, 32], strides = [1, 1]} : vector<2x128xf32> to vector<2x32xf32>
    %383 = vector.extract_strided_slice %374 {offsets = [0, 64], sizes = [2, 32], strides = [1, 1]} : vector<2x128xf32> to vector<2x32xf32>
    %384 = math.tanh %383 : vector<2x32xf32>
    %385 = arith.mulf %381, %345 : vector<2x32xf32>
    %386 = arith.mulf %380, %384 : vector<2x32xf32>
    %387 = arith.addf %385, %386 : vector<2x32xf32>
    %388 = math.tanh %387 : vector<2x32xf32>
    %389 = arith.mulf %382, %388 : vector<2x32xf32>
    %cst_89 = arith.constant dense<0.000000e+00> : vector<2x128xf32>
    %390 = tpu.matmul %347, %1, %cst_89 {dimension_numbers = #tpu.dot_dimension_numbers<[1], [0], [0], [1], [0, 0, 1, 1], [], []>} : vector<2x32xf32>, vector<32x128xf32>, vector<2x128xf32> -> vector<2x128xf32>
    %cst_90 = arith.constant dense<0.000000e+00> : vector<2x128xf32>
    %391 = tpu.matmul %367, %3, %cst_90 {dimension_numbers = #tpu.dot_dimension_numbers<[1], [0], [0], [1], [0, 0, 1, 1], [], []>} : vector<2x32xf32>, vector<32x128xf32>, vector<2x128xf32> -> vector<2x128xf32>
    %392 = arith.addf %390, %391 : vector<2x128xf32>
    %393 = vector.broadcast %5 : vector<1x128xf32> to vector<2x128xf32>
    %394 = arith.addf %392, %393 : vector<2x128xf32>
    %395 = arith.negf %394 : vector<2x128xf32>
    %396 = math.exp %395 : vector<2x128xf32>
    %cst_91 = arith.constant 1.000000e+00 : f32
    %397 = vector.broadcast %cst_91 : f32 to vector<2x128xf32>
    %398 = arith.addf %397, %396 : vector<2x128xf32>
    %399 = arith.divf %397, %398 : vector<2x128xf32>
    %400 = vector.extract_strided_slice %399 {offsets = [0, 0], sizes = [2, 32], strides = [1, 1]} : vector<2x128xf32> to vector<2x32xf32>
    %401 = vector.extract_strided_slice %399 {offsets = [0, 32], sizes = [2, 32], strides = [1, 1]} : vector<2x128xf32> to vector<2x32xf32>
    %402 = vector.extract_strided_slice %399 {offsets = [0, 96], sizes = [2, 32], strides = [1, 1]} : vector<2x128xf32> to vector<2x32xf32>
    %403 = vector.extract_strided_slice %394 {offsets = [0, 64], sizes = [2, 32], strides = [1, 1]} : vector<2x128xf32> to vector<2x32xf32>
    %404 = math.tanh %403 : vector<2x32xf32>
    %405 = arith.mulf %401, %365 : vector<2x32xf32>
    %406 = arith.mulf %400, %404 : vector<2x32xf32>
    %407 = arith.addf %405, %406 : vector<2x32xf32>
    %408 = math.tanh %407 : vector<2x32xf32>
    %409 = arith.mulf %402, %408 : vector<2x32xf32>
    %c10 = arith.constant 10 : index
    %c0_92 = arith.constant 0 : index
    %c0_93 = arith.constant 0 : index
    %410 = vector.load %arg0[%c10, %c0_92, %c0_93] : memref<12x2x8xf32, #tpu.memory_space<vmem>>, vector<1x2x8xf32>
    %411 = vector.shape_cast %410 : vector<1x2x8xf32> to vector<2x8xf32>
    %cst_94 = arith.constant dense<0.000000e+00> : vector<2x128xf32>
    %412 = tpu.matmul %411, %0, %cst_94 {dimension_numbers = #tpu.dot_dimension_numbers<[1], [0], [0], [1], [0, 0, 1, 1], [], []>} : vector<2x8xf32>, vector<8x128xf32>, vector<2x128xf32> -> vector<2x128xf32>
    %cst_95 = arith.constant dense<0.000000e+00> : vector<2x128xf32>
    %413 = tpu.matmul %389, %2, %cst_95 {dimension_numbers = #tpu.dot_dimension_numbers<[1], [0], [0], [1], [0, 0, 1, 1], [], []>} : vector<2x32xf32>, vector<32x128xf32>, vector<2x128xf32> -> vector<2x128xf32>
    %414 = arith.addf %412, %413 : vector<2x128xf32>
    %415 = vector.broadcast %4 : vector<1x128xf32> to vector<2x128xf32>
    %416 = arith.addf %414, %415 : vector<2x128xf32>
    %417 = arith.negf %416 : vector<2x128xf32>
    %418 = math.exp %417 : vector<2x128xf32>
    %cst_96 = arith.constant 1.000000e+00 : f32
    %419 = vector.broadcast %cst_96 : f32 to vector<2x128xf32>
    %420 = arith.addf %419, %418 : vector<2x128xf32>
    %421 = arith.divf %419, %420 : vector<2x128xf32>
    %422 = vector.extract_strided_slice %421 {offsets = [0, 0], sizes = [2, 32], strides = [1, 1]} : vector<2x128xf32> to vector<2x32xf32>
    %423 = vector.extract_strided_slice %421 {offsets = [0, 32], sizes = [2, 32], strides = [1, 1]} : vector<2x128xf32> to vector<2x32xf32>
    %424 = vector.extract_strided_slice %421 {offsets = [0, 96], sizes = [2, 32], strides = [1, 1]} : vector<2x128xf32> to vector<2x32xf32>
    %425 = vector.extract_strided_slice %416 {offsets = [0, 64], sizes = [2, 32], strides = [1, 1]} : vector<2x128xf32> to vector<2x32xf32>
    %426 = math.tanh %425 : vector<2x32xf32>
    %427 = arith.mulf %423, %387 : vector<2x32xf32>
    %428 = arith.mulf %422, %426 : vector<2x32xf32>
    %429 = arith.addf %427, %428 : vector<2x32xf32>
    %430 = math.tanh %429 : vector<2x32xf32>
    %431 = arith.mulf %424, %430 : vector<2x32xf32>
    %cst_97 = arith.constant dense<0.000000e+00> : vector<2x128xf32>
    %432 = tpu.matmul %389, %1, %cst_97 {dimension_numbers = #tpu.dot_dimension_numbers<[1], [0], [0], [1], [0, 0, 1, 1], [], []>} : vector<2x32xf32>, vector<32x128xf32>, vector<2x128xf32> -> vector<2x128xf32>
    %cst_98 = arith.constant dense<0.000000e+00> : vector<2x128xf32>
    %433 = tpu.matmul %409, %3, %cst_98 {dimension_numbers = #tpu.dot_dimension_numbers<[1], [0], [0], [1], [0, 0, 1, 1], [], []>} : vector<2x32xf32>, vector<32x128xf32>, vector<2x128xf32> -> vector<2x128xf32>
    %434 = arith.addf %432, %433 : vector<2x128xf32>
    %435 = vector.broadcast %5 : vector<1x128xf32> to vector<2x128xf32>
    %436 = arith.addf %434, %435 : vector<2x128xf32>
    %437 = arith.negf %436 : vector<2x128xf32>
    %438 = math.exp %437 : vector<2x128xf32>
    %cst_99 = arith.constant 1.000000e+00 : f32
    %439 = vector.broadcast %cst_99 : f32 to vector<2x128xf32>
    %440 = arith.addf %439, %438 : vector<2x128xf32>
    %441 = arith.divf %439, %440 : vector<2x128xf32>
    %442 = vector.extract_strided_slice %441 {offsets = [0, 0], sizes = [2, 32], strides = [1, 1]} : vector<2x128xf32> to vector<2x32xf32>
    %443 = vector.extract_strided_slice %441 {offsets = [0, 32], sizes = [2, 32], strides = [1, 1]} : vector<2x128xf32> to vector<2x32xf32>
    %444 = vector.extract_strided_slice %441 {offsets = [0, 96], sizes = [2, 32], strides = [1, 1]} : vector<2x128xf32> to vector<2x32xf32>
    %445 = vector.extract_strided_slice %436 {offsets = [0, 64], sizes = [2, 32], strides = [1, 1]} : vector<2x128xf32> to vector<2x32xf32>
    %446 = math.tanh %445 : vector<2x32xf32>
    %447 = arith.mulf %443, %407 : vector<2x32xf32>
    %448 = arith.mulf %442, %446 : vector<2x32xf32>
    %449 = arith.addf %447, %448 : vector<2x32xf32>
    %450 = math.tanh %449 : vector<2x32xf32>
    %451 = arith.mulf %444, %450 : vector<2x32xf32>
    %c11 = arith.constant 11 : index
    %c0_100 = arith.constant 0 : index
    %c0_101 = arith.constant 0 : index
    %452 = vector.load %arg0[%c11, %c0_100, %c0_101] : memref<12x2x8xf32, #tpu.memory_space<vmem>>, vector<1x2x8xf32>
    %453 = vector.shape_cast %452 : vector<1x2x8xf32> to vector<2x8xf32>
    %cst_102 = arith.constant dense<0.000000e+00> : vector<2x128xf32>
    %454 = tpu.matmul %453, %0, %cst_102 {dimension_numbers = #tpu.dot_dimension_numbers<[1], [0], [0], [1], [0, 0, 1, 1], [], []>} : vector<2x8xf32>, vector<8x128xf32>, vector<2x128xf32> -> vector<2x128xf32>
    %cst_103 = arith.constant dense<0.000000e+00> : vector<2x128xf32>
    %455 = tpu.matmul %431, %2, %cst_103 {dimension_numbers = #tpu.dot_dimension_numbers<[1], [0], [0], [1], [0, 0, 1, 1], [], []>} : vector<2x32xf32>, vector<32x128xf32>, vector<2x128xf32> -> vector<2x128xf32>
    %456 = arith.addf %454, %455 : vector<2x128xf32>
    %457 = vector.broadcast %4 : vector<1x128xf32> to vector<2x128xf32>
    %458 = arith.addf %456, %457 : vector<2x128xf32>
    %459 = arith.negf %458 : vector<2x128xf32>
    %460 = math.exp %459 : vector<2x128xf32>
    %cst_104 = arith.constant 1.000000e+00 : f32
    %461 = vector.broadcast %cst_104 : f32 to vector<2x128xf32>
    %462 = arith.addf %461, %460 : vector<2x128xf32>
    %463 = arith.divf %461, %462 : vector<2x128xf32>
    %464 = vector.extract_strided_slice %463 {offsets = [0, 0], sizes = [2, 32], strides = [1, 1]} : vector<2x128xf32> to vector<2x32xf32>
    %465 = vector.extract_strided_slice %463 {offsets = [0, 32], sizes = [2, 32], strides = [1, 1]} : vector<2x128xf32> to vector<2x32xf32>
    %466 = vector.extract_strided_slice %463 {offsets = [0, 96], sizes = [2, 32], strides = [1, 1]} : vector<2x128xf32> to vector<2x32xf32>
    %467 = vector.extract_strided_slice %458 {offsets = [0, 64], sizes = [2, 32], strides = [1, 1]} : vector<2x128xf32> to vector<2x32xf32>
    %468 = math.tanh %467 : vector<2x32xf32>
    %469 = arith.mulf %465, %429 : vector<2x32xf32>
    %470 = arith.mulf %464, %468 : vector<2x32xf32>
    %471 = arith.addf %469, %470 : vector<2x32xf32>
    %472 = math.tanh %471 : vector<2x32xf32>
    %473 = arith.mulf %466, %472 : vector<2x32xf32>
    %cst_105 = arith.constant dense<0.000000e+00> : vector<2x128xf32>
    %474 = tpu.matmul %431, %1, %cst_105 {dimension_numbers = #tpu.dot_dimension_numbers<[1], [0], [0], [1], [0, 0, 1, 1], [], []>} : vector<2x32xf32>, vector<32x128xf32>, vector<2x128xf32> -> vector<2x128xf32>
    %cst_106 = arith.constant dense<0.000000e+00> : vector<2x128xf32>
    %475 = tpu.matmul %451, %3, %cst_106 {dimension_numbers = #tpu.dot_dimension_numbers<[1], [0], [0], [1], [0, 0, 1, 1], [], []>} : vector<2x32xf32>, vector<32x128xf32>, vector<2x128xf32> -> vector<2x128xf32>
    %476 = arith.addf %474, %475 : vector<2x128xf32>
    %477 = vector.broadcast %5 : vector<1x128xf32> to vector<2x128xf32>
    %478 = arith.addf %476, %477 : vector<2x128xf32>
    %479 = arith.negf %478 : vector<2x128xf32>
    %480 = math.exp %479 : vector<2x128xf32>
    %cst_107 = arith.constant 1.000000e+00 : f32
    %481 = vector.broadcast %cst_107 : f32 to vector<2x128xf32>
    %482 = arith.addf %481, %480 : vector<2x128xf32>
    %483 = arith.divf %481, %482 : vector<2x128xf32>
    %484 = vector.extract_strided_slice %483 {offsets = [0, 0], sizes = [2, 32], strides = [1, 1]} : vector<2x128xf32> to vector<2x32xf32>
    %485 = vector.extract_strided_slice %483 {offsets = [0, 32], sizes = [2, 32], strides = [1, 1]} : vector<2x128xf32> to vector<2x32xf32>
    %486 = vector.extract_strided_slice %483 {offsets = [0, 96], sizes = [2, 32], strides = [1, 1]} : vector<2x128xf32> to vector<2x32xf32>
    %487 = vector.extract_strided_slice %478 {offsets = [0, 64], sizes = [2, 32], strides = [1, 1]} : vector<2x128xf32> to vector<2x32xf32>
    %488 = math.tanh %487 : vector<2x32xf32>
    %489 = arith.mulf %485, %449 : vector<2x32xf32>
    %490 = arith.mulf %484, %488 : vector<2x32xf32>
    %491 = arith.addf %489, %490 : vector<2x32xf32>
    %492 = math.tanh %491 : vector<2x32xf32>
    %493 = arith.mulf %486, %492 : vector<2x32xf32>
    %cst_108 = arith.constant dense<0.000000e+00> : vector<2x128xf32>
    %494 = tpu.matmul %473, %1, %cst_108 {dimension_numbers = #tpu.dot_dimension_numbers<[1], [0], [0], [1], [0, 0, 1, 1], [], []>} : vector<2x32xf32>, vector<32x128xf32>, vector<2x128xf32> -> vector<2x128xf32>
    %cst_109 = arith.constant dense<0.000000e+00> : vector<2x128xf32>
    %495 = tpu.matmul %493, %3, %cst_109 {dimension_numbers = #tpu.dot_dimension_numbers<[1], [0], [0], [1], [0, 0, 1, 1], [], []>} : vector<2x32xf32>, vector<32x128xf32>, vector<2x128xf32> -> vector<2x128xf32>
    %496 = arith.addf %494, %495 : vector<2x128xf32>
    %497 = vector.broadcast %5 : vector<1x128xf32> to vector<2x128xf32>
    %498 = arith.addf %496, %497 : vector<2x128xf32>
    %499 = arith.negf %498 : vector<2x128xf32>
    %500 = math.exp %499 : vector<2x128xf32>
    %cst_110 = arith.constant 1.000000e+00 : f32
    %501 = vector.broadcast %cst_110 : f32 to vector<2x128xf32>
    %502 = arith.addf %501, %500 : vector<2x128xf32>
    %503 = arith.divf %501, %502 : vector<2x128xf32>
    %504 = vector.extract_strided_slice %503 {offsets = [0, 0], sizes = [2, 32], strides = [1, 1]} : vector<2x128xf32> to vector<2x32xf32>
    %505 = vector.extract_strided_slice %503 {offsets = [0, 32], sizes = [2, 32], strides = [1, 1]} : vector<2x128xf32> to vector<2x32xf32>
    %506 = vector.extract_strided_slice %503 {offsets = [0, 96], sizes = [2, 32], strides = [1, 1]} : vector<2x128xf32> to vector<2x32xf32>
    %507 = vector.extract_strided_slice %498 {offsets = [0, 64], sizes = [2, 32], strides = [1, 1]} : vector<2x128xf32> to vector<2x32xf32>
    %508 = math.tanh %507 : vector<2x32xf32>
    %509 = arith.mulf %505, %491 : vector<2x32xf32>
    %510 = arith.mulf %504, %508 : vector<2x32xf32>
    %511 = arith.addf %509, %510 : vector<2x32xf32>
    %512 = math.tanh %511 : vector<2x32xf32>
    %513 = arith.mulf %506, %512 : vector<2x32xf32>
    %c0_111 = arith.constant 0 : index
    %c0_112 = arith.constant 0 : index
    %514 = vector.load %arg7[%c0_111, %c0_112] : memref<32x128xf32, #tpu.memory_space<vmem>>, vector<32x128xf32>
    %cst_113 = arith.constant dense<0.000000e+00> : vector<2x128xf32>
    %515 = tpu.matmul %513, %514, %cst_113 {dimension_numbers = #tpu.dot_dimension_numbers<[1], [0], [0], [1], [0, 0, 1, 1], [], []>} : vector<2x32xf32>, vector<32x128xf32>, vector<2x128xf32> -> vector<2x128xf32>
    %c0_114 = arith.constant 0 : index
    %c0_115 = arith.constant 0 : index
    %516 = vector.load %arg8[%c0_114, %c0_115] : memref<1x128xf32, #tpu.memory_space<vmem>>, vector<1x128xf32>
    %517 = vector.broadcast %516 : vector<1x128xf32> to vector<2x128xf32>
    %518 = arith.addf %515, %517 : vector<2x128xf32>
    %c0_116 = arith.constant 0 : index
    %c0_117 = arith.constant 0 : index
    %519 = vector.load %arg9[%c0_116, %c0_117] : memref<2x128xf32, #tpu.memory_space<vmem>>, vector<2x128xf32>
    tpu.vector_store %arg9[%c0_116, %c0_117], %518 {strides = array<i32>} : memref<2x128xf32, #tpu.memory_space<vmem>>, vector<2x128xf32>,
    return
  }
}

</mosaic_0001>

<llo_original>
// kernel: lstm_predictor_forward.1
$region0: #{lstm_predictor_forward.1}
  #allocation0 [shape = 'u32[]', space=smem, size = 0x4, offset = 0x4, fixed_abs, tag = 'smem constant byte address 0x4 - core index']
  #allocation1 [shape = 'u32[72,128]{1,0:T(1,128)}', space=vmem, size = 0x9000, scoped, tag = 'internal scratch']
  %s0 = inlined_call_operand.vmem [shape: f32[12,2,8], index: 0, kind: input, shape index: {}]
  %s1 = inlined_call_operand.vmem [shape: f32[8,128], index: 1, kind: input, shape index: {}]
  %s2 = inlined_call_operand.vmem [shape: f32[32,128], index: 2, kind: input, shape index: {}]
  %s3 = inlined_call_operand.vmem [shape: f32[1,128], index: 3, kind: input, shape index: {}]
  %s4 = inlined_call_operand.hbm [shape: f32[32,128], index: 4, kind: input, shape index: {}]
  %s5 = inlined_call_operand.hbm [shape: f32[32,128], index: 5, kind: input, shape index: {}]
  %s6 = inlined_call_operand.vmem [shape: f32[1,128], index: 6, kind: input, shape index: {}]
  %s7 = inlined_call_operand.hbm [shape: f32[32,128], index: 7, kind: input, shape index: {}]
  %s8 = inlined_call_operand.vmem [shape: f32[1,128], index: 8, kind: input, shape index: {}]
  %s9 = inlined_call_operand.vmem [shape: f32[2,128], index: 9, kind: output, shape index: {}]
  %s10 = sld [smem:[#allocation0]]
  $region58: #{lstm_predictor_forward.1} parent=0
    _
  %s12 = ssub.s32 1, %s10
  %s13 = scalar_select 0, %s12, %s10
  $region1: #{lstm_predictor_forward.1} parent=0
    #allocation2 [shape = 'u8[16384]{0}', space=vmem, size = 0x4000, scoped, tag = 'input window, operand 4, single buffered']
    #allocation3 [shape = 's32[1]{0}', space=sflag, size = 0x4, scoped, tag = 'scoped memory for lstm_predictor_forward.1']
    #allocation4 [shape = 'u8[16384]{0}', space=vmem, size = 0x4000, scoped, tag = 'input window, operand 5, single buffered']
    #allocation5 [shape = 's32[1]{0}', space=sflag, size = 0x4, scoped, tag = 'scoped memory for lstm_predictor_forward.1']
    #allocation6 [shape = 'u8[16384]{0}', space=vmem, size = 0x4000, scoped, tag = 'input window, operand 7, single buffered']
    %14 = vsyncpa [#allocation3], 0
    %15 = vsyncpa [#allocation5], 0
    // Predicated region
    $region2: #{lstm_predictor_forward.1} parent=1 // pred_check
      _
    $region3: #{lstm_predictor_forward.1} parent=1 // pred_check_branch
      %17 = sbr.rel (0) target = $region5
    $region4: #{lstm_predictor_forward.1} parent=1 // pred_region
      _
    $region5: #{lstm_predictor_forward.1} parent=1 // pred_fallthru
      _
    // Predicated region
    $region6: #{lstm_predictor_forward.1} parent=1 // pred_check
      _
    $region7: #{lstm_predictor_forward.1} parent=1 // pred_check_branch
      %19 = sbr.rel (0) target = $region9
    $region8: #{lstm_predictor_forward.1} parent=1 // pred_region
      _
    $region9: #{lstm_predictor_forward.1} parent=1 // pred_fallthru
      _
    // Predicated region
    $region10: #{lstm_predictor_forward.1} parent=1 // pred_check
      _
    $region11: #{lstm_predictor_forward.1} parent=1 // pred_check_branch
      %21 = sbr.rel (0) target = $region13
    $region12: #{lstm_predictor_forward.1} parent=1 // pred_region
      _
    $region13: #{lstm_predictor_forward.1} parent=1 // pred_fallthru
      _
    // Predicated region
    $region14: #{lstm_predictor_forward.1} parent=1 // pred_check
      _
    $region15: #{lstm_predictor_forward.1} parent=1 // pred_check_branch
      %23 = sbr.rel (0) target = $region17
    $region16: #{lstm_predictor_forward.1} parent=1 // pred_region
      _
    $region17: #{lstm_predictor_forward.1} parent=1 // pred_fallthru
      _
    // Predicated region
    $region18: #{lstm_predictor_forward.1} parent=1 // pred_check
      _
    $region19: #{lstm_predictor_forward.1} parent=1 // pred_check_branch
      %25 = sbr.rel (0) target = $region21
    $region20: #{lstm_predictor_forward.1} parent=1 // pred_region
      %27 = vsyncadd [#allocation3], 0
      %s28 = sshll.u32 %s4, 4
      %s29 = int_to_ptr.hbm [resolvable:$true] %s28
      %s30 = sshll.u32 [#allocation2], 4
      %s31 = int_to_ptr.vmem [resolvable:$true] %s30
      %36 = dma.hbm_to_vmem [thread:$0]  %s29, 512, %s31, [#allocation3], 128, 128, 8
    $region21: #{lstm_predictor_forward.1} parent=1 // pred_fallthru
      _
    // Predicated region
    $region22: #{lstm_predictor_forward.1} parent=1 // pred_check
      _
    $region23: #{lstm_predictor_forward.1} parent=1 // pred_check_branch
      %38 = sbr.rel (0) target = $region25
    $region24: #{lstm_predictor_forward.1} parent=1 // pred_region
      %40 = vsyncadd [#allocation5], 0
      %s41 = sshll.u32 %s5, 4
      %s42 = int_to_ptr.hbm [resolvable:$true] %s41
      %s43 = sshll.u32 [#allocation4], 4
      %s44 = int_to_ptr.vmem [resolvable:$true] %s43
      %49 = dma.hbm_to_vmem [thread:$0]  %s42, 512, %s44, [#allocation5], 128, 128, 8
    $region25: #{lstm_predictor_forward.1} parent=1 // pred_fallthru
      _
    // Predicated region
    $region26: #{lstm_predictor_forward.1} parent=1 // pred_check
      _
    $region27: #{lstm_predictor_forward.1} parent=1 // pred_check_branch
      %51 = sbr.rel (0) target = $region29
    $region28: #{lstm_predictor_forward.1} parent=1 // pred_region
      _
    $region29: #{lstm_predictor_forward.1} parent=1 // pred_fallthru
      _
    // Predicated region
    $region30: #{lstm_predictor_forward.1} parent=1 // pred_check
      _
    $region31: #{lstm_predictor_forward.1} parent=1 // pred_check_branch
      %53 = sbr.rel (0) target = $region33
    $region32: #{lstm_predictor_forward.1} parent=1 // pred_region
      %55 = vsyncadd [#allocation5], 0
      %s56 = sshll.u32 %s7, 4
      %s57 = int_to_ptr.hbm [resolvable:$true] %s56
      %s58 = sshll.u32 [#allocation6], 4
      %s59 = int_to_ptr.vmem [resolvable:$true] %s58
      %64 = dma.hbm_to_vmem [thread:$0]  %s57, 512, %s59, [#allocation5], 128, 128, 8
    $region33: #{lstm_predictor_forward.1} parent=1 // pred_fallthru
      _
    // Predicated region
    $region34: #{lstm_predictor_forward.1} parent=1 // pred_check
      _
    $region35: #{lstm_predictor_forward.1} parent=1 // pred_check_branch
      %66 = sbr.rel (0) target = $region37
    $region36: #{lstm_predictor_forward.1} parent=1 // pred_region
      _
    $region37: #{lstm_predictor_forward.1} parent=1 // pred_fallthru
      _
    // Predicated region
    $region38: #{lstm_predictor_forward.1} parent=1 // pred_check
      _
    $region39: #{lstm_predictor_forward.1} parent=1 // pred_check_branch
      %68 = sbr.rel (0) target = $region41
    $region40: #{lstm_predictor_forward.1} parent=1 // pred_region
      %70 = dma.done [#allocation3], 512
    $region41: #{lstm_predictor_forward.1} parent=1 // pred_fallthru
      _
    // Predicated region
    $region42: #{lstm_predictor_forward.1} parent=1 // pred_check
      _
    $region43: #{lstm_predictor_forward.1} parent=1 // pred_check_branch
      %72 = sbr.rel (0) target = $region45
    $region44: #{lstm_predictor_forward.1} parent=1 // pred_region
      %74 = dma.done [#allocation5], 512
    $region45: #{lstm_predictor_forward.1} parent=1 // pred_fallthru
      _
    // Predicated region
    $region46: #{lstm_predictor_forward.1} parent=1 // pred_check
      _
    $region47: #{lstm_predictor_forward.1} parent=1 // pred_check_branch
      %76 = sbr.rel (0) target = $region49
    $region48: #{lstm_predictor_forward.1} parent=1 // pred_region
      %78 = dma.done [#allocation5], 512
    $region49: #{lstm_predictor_forward.1} parent=1 // pred_fallthru
      _
    %v79 = vld [vmem:[%s1] sm:$0xff]
    %v80 = vld [vmem:[#allocation2] sm:$0xff]
    %v81 = vld [vmem:[#allocation2 + $0x8] sm:$0xff]
    %v82 = vld [vmem:[#allocation2 + $0x10] sm:$0xff]
    %v83 = vld [vmem:[#allocation2 + $0x18] sm:$0xff]
    %v84 = vld [vmem:[%s2] sm:$0xff]
    %v85 = vld [vmem:[%s2 + $0x8] sm:$0xff]
    %v86 = vld [vmem:[%s2 + $0x10] sm:$0xff]
    %v87 = vld [vmem:[%s2 + $0x18] sm:$0xff]
    %v88 = vld [vmem:[#allocation4] sm:$0xff]
    %v89 = vld [vmem:[#allocation4 + $0x8] sm:$0xff]
    %v90 = vld [vmem:[#allocation4 + $0x10] sm:$0xff]
    %v91 = vld [vmem:[#allocation4 + $0x18] sm:$0xff]
    %v92 = vld [vmem:[%s3] sm:$0x1]
    %v93 = vld [vmem:[%s6] sm:$0x1]
    %v94 = vld [vmem:[%s0] sm:$0x3]
    %vm95 = vcmask 261120
    %v97 = vsel %vm95, 0.0, 0
    %99 = vmatpush.msra.mxu0 0.0
    %100 = vmatpush.msra.mxu0 0.0
    %101 = vmatpush.msra.mxu0 0.0
    %102 = vmatpush.msra.mxu0 0.0
    %103 = vmatpush.msra.mxu0 0.0
    %104 = vmatpush.msra.mxu0 0.0
    %105 = vmatpush.msra.mxu0 0.0
    %106 = vmatpush.msra.mxu0 0.0
    %107 = vmatpush.msra.mxu0 0.0
    %108 = vmatpush.msra.mxu0 0.0
    %109 = vmatpush.msra.mxu0 0.0
    %110 = vmatpush.msra.mxu0 0.0
    %111 = vmatpush.msra.mxu0 %v87
    %112 = vmatpush.msra.mxu0 %v86
    %113 = vmatpush.msra.mxu0 %v85
    %114 = vmatpush.msra.mxu0 %v84
    %115 = vmatmul.f32.gmra.mxu0 %v97
    %v116 = vpop.f32.mrf.mxu0
    %v117 = vadd.f32 0.0, %v116
    %118 = vdwg.mxu0
    %vm119 = vcmask 64512
    %v121 = vsel %vm119, %v94, 0
    %123 = vmatpush.msra.mxu0 0.0
    %124 = vmatpush.msra.mxu0 0.0
    %125 = vmatpush.msra.mxu0 0.0
    %126 = vmatpush.msra.mxu0 0.0
    %127 = vmatpush.msra.mxu0 0.0
    %128 = vmatpush.msra.mxu0 0.0
    %129 = vmatpush.msra.mxu0 0.0
    %130 = vmatpush.msra.mxu0 0.0
    %131 = vmatpush.msra.mxu0 0.0
    %132 = vmatpush.msra.mxu0 0.0
    %133 = vmatpush.msra.mxu0 0.0
    %134 = vmatpush.msra.mxu0 0.0
    %135 = vmatpush.msra.mxu0 0.0
    %136 = vmatpush.msra.mxu0 0.0
    %137 = vmatpush.msra.mxu0 0.0
    %138 = vmatpush.msra.mxu0 %v79
    %139 = vmatmul.f32.gmra.mxu0 %v121
    %v140 = vpop.f32.mrf.mxu0
    %v141 = vadd.f32 %v117, %v140
    %142 = vdwg.mxu0
    %v144 = vperm.slane %v92, 0
    %v146 = vadd.f32 %v141, %v144
    %v147 = vxor.u32 %v146, 2147483648
    %v148 = vmul.f32 %v147, 1.442695
    %v149 = vpow.pop %v148
    %v150 = vadd.f32 %v149, 1.0
    %v151 = vrcp.pop %v150
    %v152 = vmul.f32 %v150, %v151
    %v153 = vsub.f32 1.0, %v152
    %v154 = vmul.f32 %v151, %v153
    %v155 = vadd.f32 %v151, %v154
    %vm156 = vweird.f32 %v150
    %vm157 = vweird.f32 %v151
    %vm158 = vmor %vm156, %vm157
    %v159 = vsel %vm158, %v151, %v155
    %v160 = vand.u32 2147483647, %v150
    %vm161 = vcmp.eq.f32.partialorder %v160, 8.507059e+37
    %v162 = vand.u32 %v150, 2147483648
    %v163 = vor.u32 1.1754944e-38, %v162
    %v164 = vsel %vm161, %v163, %v159
    %v165 = vmul.f32 1.0, %v164
    %v166 = vtanh.pop %v146
    %v167 = vmul.f32 %v165, 0.0
    %169 = vrot.lane.b32.xlu0 %v166, 64
    %v170 = vpop.permute.xlu0 %169
    %v172 = vmul.f32 %v165, %v170
    %174 = vrot.lane.b32.xlu0 %v172, 32
    %v175 = vpop.permute.xlu0 %174
    %v177 = vadd.f32 %v167, %v175
    %v178 = vtanh.pop %v177
    %180 = vrot.lane.b32.xlu0 %v178, 64
    %v181 = vpop.permute.xlu0 %180
    %v183 = vmul.f32 %v165, %v181
    %s184 = scalar_lea.vmem %s0, 2
    %v185 = vld [vmem:[%s184] sm:$0x3]
    %187 = vrot.lane.b32.xlu0 %v183, 32
    %v188 = vpop.permute.xlu0 %187
    %v189 = vsel %vm95, %v188, 0
    %191 = vmatpush.msra.mxu0 0.0
    %192 = vmatpush.msra.mxu0 0.0
    %193 = vmatpush.msra.mxu0 0.0
    %194 = vmatpush.msra.mxu0 0.0
    %195 = vmatpush.msra.mxu0 0.0
    %196 = vmatpush.msra.mxu0 0.0
    %197 = vmatpush.msra.mxu0 0.0
    %198 = vmatpush.msra.mxu0 0.0
    %199 = vmatpush.msra.mxu0 0.0
    %200 = vmatpush.msra.mxu0 0.0
    %201 = vmatpush.msra.mxu0 0.0
    %202 = vmatpush.msra.mxu0 0.0
    %203 = vmatpush.msra.mxu0 %v87
    %204 = vmatpush.msra.mxu0 %v86
    %205 = vmatpush.msra.mxu0 %v85
    %206 = vmatpush.msra.mxu0 %v84
    %207 = vmatmul.f32.gmra.mxu0 %v189
    %v208 = vpop.f32.mrf.mxu0
    %v209 = vadd.f32 0.0, %v208
    %210 = vdwg.mxu0
    %v212 = vsel %vm119, %v185, 0
    %214 = vmatpush.msra.mxu0 0.0
    %215 = vmatpush.msra.mxu0 0.0
    %216 = vmatpush.msra.mxu0 0.0
    %217 = vmatpush.msra.mxu0 0.0
    %218 = vmatpush.msra.mxu0 0.0
    %219 = vmatpush.msra.mxu0 0.0
    %220 = vmatpush.msra.mxu0 0.0
    %221 = vmatpush.msra.mxu0 0.0
    %222 = vmatpush.msra.mxu0 0.0
    %223 = vmatpush.msra.mxu0 0.0
    %224 = vmatpush.msra.mxu0 0.0
    %225 = vmatpush.msra.mxu0 0.0
    %226 = vmatpush.msra.mxu0 0.0
    %227 = vmatpush.msra.mxu0 0.0
    %228 = vmatpush.msra.mxu0 0.0
    %229 = vmatpush.msra.mxu0 %v79
    %230 = vmatmul.f32.gmra.mxu0 %v212
    %v231 = vpop.f32.mrf.mxu0
    %v232 = vadd.f32 %v209, %v231
    %233 = vdwg.mxu0
    %v234 = vadd.f32 %v232, %v144
    %v235 = vxor.u32 %v234, 2147483648
    %v236 = vmul.f32 %v235, 1.442695
    %v237 = vpow.pop %v236
    %v238 = vadd.f32 %v237, 1.0
    %v239 = vrcp.pop %v238
    %v240 = vmul.f32 %v238, %v239
    %v241 = vsub.f32 1.0, %v240
    %v242 = vmul.f32 %v239, %v241
    %v243 = vadd.f32 %v239, %v242
    %vm244 = vweird.f32 %v238
    %vm245 = vweird.f32 %v239
    %vm246 = vmor %vm244, %vm245
    %v247 = vsel %vm246, %v239, %v243
    %v248 = vand.u32 2147483647, %v238
    %vm249 = vcmp.eq.f32.partialorder %v248, 8.507059e+37
    %v250 = vand.u32 %v238, 2147483648
    %v251 = vor.u32 1.1754944e-38, %v250
    %v252 = vsel %vm249, %v251, %v247
    %v253 = vmul.f32 1.0, %v252
    %v254 = vtanh.pop %v234
    %v255 = vmul.f32 %v253, %v177
    %257 = vrot.lane.b32.xlu0 %v254, 64
    %v258 = vpop.permute.xlu0 %257
    %v260 = vmul.f32 %v253, %v258
    %262 = vrot.lane.b32.xlu0 %v260, 32
    %v263 = vpop.permute.xlu0 %262
    %v265 = vadd.f32 %v255, %v263
    %v266 = vtanh.pop %v265
    %268 = vrot.lane.b32.xlu0 %v266, 64
    %v269 = vpop.permute.xlu0 %268
    %v271 = vmul.f32 %v253, %v269
    %272 = vmatpush.msra.mxu0 0.0
    %273 = vmatpush.msra.mxu0 0.0
    %274 = vmatpush.msra.mxu0 0.0
    %275 = vmatpush.msra.mxu0 0.0
    %276 = vmatpush.msra.mxu0 0.0
    %277 = vmatpush.msra.mxu0 0.0
    %278 = vmatpush.msra.mxu0 0.0
    %279 = vmatpush.msra.mxu0 0.0
    %280 = vmatpush.msra.mxu0 0.0
    %281 = vmatpush.msra.mxu0 0.0
    %282 = vmatpush.msra.mxu0 0.0
    %283 = vmatpush.msra.mxu0 0.0
    %284 = vmatpush.msra.mxu0 %v91
    %285 = vmatpush.msra.mxu0 %v90
    %286 = vmatpush.msra.mxu0 %v89
    %287 = vmatpush.msra.mxu0 %v88
    %288 = vmatmul.f32.gmra.mxu0 %v97
    %v289 = vpop.f32.mrf.mxu0
    %v290 = vadd.f32 0.0, %v289
    %291 = vdwg.mxu0
    %292 = vmatpush.msra.mxu0 0.0
    %293 = vmatpush.msra.mxu0 0.0
    %294 = vmatpush.msra.mxu0 0.0
    %295 = vmatpush.msra.mxu0 0.0
    %296 = vmatpush.msra.mxu0 0.0
    %297 = vmatpush.msra.mxu0 0.0
    %298 = vmatpush.msra.mxu0 0.0
    %299 = vmatpush.msra.mxu0 0.0
    %300 = vmatpush.msra.mxu0 0.0
    %301 = vmatpush.msra.mxu0 0.0
    %302 = vmatpush.msra.mxu0 0.0
    %303 = vmatpush.msra.mxu0 0.0
    %304 = vmatpush.msra.mxu0 %v83
    %305 = vmatpush.msra.mxu0 %v82
    %306 = vmatpush.msra.mxu0 %v81
    %307 = vmatpush.msra.mxu0 %v80
    %308 = vmatmul.f32.gmra.mxu0 %v189
    %v309 = vpop.f32.mrf.mxu0
    %v310 = vadd.f32 %v290, %v309
    %311 = vdwg.mxu0
    %v313 = vperm.slane %v93, 0
    %v315 = vadd.f32 %v310, %v313
    %v316 = vxor.u32 %v315, 2147483648
    %v317 = vmul.f32 %v316, 1.442695
    %v318 = vpow.pop %v317
    %v319 = vadd.f32 %v318, 1.0
    %v320 = vrcp.pop %v319
    %v321 = vmul.f32 %v319, %v320
    %v322 = vsub.f32 1.0, %v321
    %v323 = vmul.f32 %v320, %v322
    %v324 = vadd.f32 %v320, %v323
    %vm325 = vweird.f32 %v319
    %vm326 = vweird.f32 %v320
    %vm327 = vmor %vm325, %vm326
    %v328 = vsel %vm327, %v320, %v324
    %v329 = vand.u32 2147483647, %v319
    %vm330 = vcmp.eq.f32.partialorder %v329, 8.507059e+37
    %v331 = vand.u32 %v319, 2147483648
    %v332 = vor.u32 1.1754944e-38, %v331
    %v333 = vsel %vm330, %v332, %v328
    %v334 = vmul.f32 1.0, %v333
    %v335 = vtanh.pop %v315
    %v336 = vmul.f32 %v334, 0.0
    %338 = vrot.lane.b32.xlu0 %v335, 64
    %v339 = vpop.permute.xlu0 %338
    %v341 = vmul.f32 %v334, %v339
    %343 = vrot.lane.b32.xlu0 %v341, 32
    %v344 = vpop.permute.xlu0 %343
    %v346 = vadd.f32 %v336, %v344
    %v347 = vtanh.pop %v346
    %349 = vrot.lane.b32.xlu0 %v347, 64
    %v350 = vpop.permute.xlu0 %349
    %v352 = vmul.f32 %v334, %v350
    %s353 = scalar_lea.vmem %s0, 4
    %v354 = vld [vmem:[%s353] sm:$0x3]
    %356 = vrot.lane.b32.xlu0 %v271, 32
    %v357 = vpop.permute.xlu0 %356
    %v358 = vsel %vm95, %v357, 0
    %360 = vmatpush.msra.mxu0 0.0
    %361 = vmatpush.msra.mxu0 0.0
    %362 = vmatpush.msra.mxu0 0.0
    %363 = vmatpush.msra.mxu0 0.0
    %364 = vmatpush.msra.mxu0 0.0
    %365 = vmatpush.msra.mxu0 0.0
    %366 = vmatpush.msra.mxu0 0.0
    %367 = vmatpush.msra.mxu0 0.0
    %368 = vmatpush.msra.mxu0 0.0
    %369 = vmatpush.msra.mxu0 0.0
    %370 = vmatpush.msra.mxu0 0.0
    %371 = vmatpush.msra.mxu0 0.0
    %372 = vmatpush.msra.mxu0 %v87
    %373 = vmatpush.msra.mxu0 %v86
    %374 = vmatpush.msra.mxu0 %v85
    %375 = vmatpush.msra.mxu0 %v84
    %376 = vmatmul.f32.gmra.mxu0 %v358
    %v377 = vpop.f32.mrf.mxu0
    %v378 = vadd.f32 0.0, %v377
    %379 = vdwg.mxu0
    %v381 = vsel %vm119, %v354, 0
    %383 = vmatpush.msra.mxu0 0.0
    %384 = vmatpush.msra.mxu0 0.0
    %385 = vmatpush.msra.mxu0 0.0
    %386 = vmatpush.msra.mxu0 0.0
    %387 = vmatpush.msra.mxu0 0.0
    %388 = vmatpush.msra.mxu0 0.0
    %389 = vmatpush.msra.mxu0 0.0
    %390 = vmatpush.msra.mxu0 0.0
    %391 = vmatpush.msra.mxu0 0.0
    %392 = vmatpush.msra.mxu0 0.0
    %393 = vmatpush.msra.mxu0 0.0
    %394 = vmatpush.msra.mxu0 0.0
    %395 = vmatpush.msra.mxu0 0.0
    %396 = vmatpush.msra.mxu0 0.0
    %397 = vmatpush.msra.mxu0 0.0
    %398 = vmatpush.msra.mxu0 %v79
    %399 = vmatmul.f32.gmra.mxu0 %v381
    %v400 = vpop.f32.mrf.mxu0
    %v401 = vadd.f32 %v378, %v400
    %402 = vdwg.mxu0
    %v403 = vadd.f32 %v401, %v144
    %v404 = vxor.u32 %v403, 2147483648
    %v405 = vmul.f32 %v404, 1.442695
    %v406 = vpow.pop %v405
    %v407 = vadd.f32 %v406, 1.0
    %v408 = vrcp.pop %v407
    %v409 = vmul.f32 %v407, %v408
    %v410 = vsub.f32 1.0, %v409
    %v411 = vmul.f32 %v408, %v410
    %v412 = vadd.f32 %v408, %v411
    %vm413 = vweird.f32 %v407
    %vm414 = vweird.f32 %v408
    %vm415 = vmor %vm413, %vm414
    %v416 = vsel %vm415, %v408, %v412
    %v417 = vand.u32 2147483647, %v407
    %vm418 = vcmp.eq.f32.partialorder %v417, 8.507059e+37
    %v419 = vand.u32 %v407, 2147483648
    %v420 = vor.u32 1.1754944e-38, %v419
    %v421 = vsel %vm418, %v420, %v416
    %v422 = vmul.f32 1.0, %v421
    %v423 = vtanh.pop %v403
    %v424 = vmul.f32 %v422, %v265
    %426 = vrot.lane.b32.xlu0 %v423, 64
    %v427 = vpop.permute.xlu0 %426
    %v429 = vmul.f32 %v422, %v427
    %431 = vrot.lane.b32.xlu0 %v429, 32
    %v432 = vpop.permute.xlu0 %431
    %v434 = vadd.f32 %v424, %v432
    %v435 = vtanh.pop %v434
    %437 = vrot.lane.b32.xlu0 %v435, 64
    %v438 = vpop.permute.xlu0 %437
    %v440 = vmul.f32 %v422, %v438
    %442 = vrot.lane.b32.xlu0 %v352, 32
    %v443 = vpop.permute.xlu0 %442
    %v444 = vsel %vm95, %v443, 0
    %446 = vmatpush.msra.mxu0 0.0
    %447 = vmatpush.msra.mxu0 0.0
    %448 = vmatpush.msra.mxu0 0.0
    %449 = vmatpush.msra.mxu0 0.0
    %450 = vmatpush.msra.mxu0 0.0
    %451 = vmatpush.msra.mxu0 0.0
    %452 = vmatpush.msra.mxu0 0.0
    %453 = vmatpush.msra.mxu0 0.0
    %454 = vmatpush.msra.mxu0 0.0
    %455 = vmatpush.msra.mxu0 0.0
    %456 = vmatpush.msra.mxu0 0.0
    %457 = vmatpush.msra.mxu0 0.0
    %458 = vmatpush.msra.mxu0 %v91
    %459 = vmatpush.msra.mxu0 %v90
    %460 = vmatpush.msra.mxu0 %v89
    %461 = vmatpush.msra.mxu0 %v88
    %462 = vmatmul.f32.gmra.mxu0 %v444
    %v463 = vpop.f32.mrf.mxu0
    %v464 = vadd.f32 0.0, %v463
    %465 = vdwg.mxu0
    %466 = vmatpush.msra.mxu0 0.0
    %467 = vmatpush.msra.mxu0 0.0
    %468 = vmatpush.msra.mxu0 0.0
    %469 = vmatpush.msra.mxu0 0.0
    %470 = vmatpush.msra.mxu0 0.0
    %471 = vmatpush.msra.mxu0 0.0
    %472 = vmatpush.msra.mxu0 0.0
    %473 = vmatpush.msra.mxu0 0.0
    %474 = vmatpush.msra.mxu0 0.0
    %475 = vmatpush.msra.mxu0 0.0
    %476 = vmatpush.msra.mxu0 0.0
    %477 = vmatpush.msra.mxu0 0.0
    %478 = vmatpush.msra.mxu0 %v83
    %479 = vmatpush.msra.mxu0 %v82
    %480 = vmatpush.msra.mxu0 %v81
    %481 = vmatpush.msra.mxu0 %v80
    %482 = vmatmul.f32.gmra.mxu0 %v358
    %v483 = vpop.f32.mrf.mxu0
    %v484 = vadd.f32 %v464, %v483
    %485 = vdwg.mxu0
    %v486 = vadd.f32 %v484, %v313
    %v487 = vxor.u32 %v486, 2147483648
    %v488 = vmul.f32 %v487, 1.442695
    %v489 = vpow.pop %v488
    %v490 = vadd.f32 %v489, 1.0
    %v491 = vrcp.pop %v490
    %v492 = vmul.f32 %v490, %v491
    %v493 = vsub.f32 1.0, %v492
    %v494 = vmul.f32 %v491, %v493
    %v495 = vadd.f32 %v491, %v494
    %vm496 = vweird.f32 %v490
    %vm497 = vweird.f32 %v491
    %vm498 = vmor %vm496, %vm497
    %v499 = vsel %vm498, %v491, %v495
    %v500 = vand.u32 2147483647, %v490
    %vm501 = vcmp.eq.f32.partialorder %v500, 8.507059e+37
    %v502 = vand.u32 %v490, 2147483648
    %v503 = vor.u32 1.1754944e-38, %v502
    %v504 = vsel %vm501, %v503, %v499
    %v505 = vmul.f32 1.0, %v504
    %v506 = vtanh.pop %v486
    %v507 = vmul.f32 %v505, %v346
    %509 = vrot.lane.b32.xlu0 %v506, 64
    %v510 = vpop.permute.xlu0 %509
    %v512 = vmul.f32 %v505, %v510
    %514 = vrot.lane.b32.xlu0 %v512, 32
    %v515 = vpop.permute.xlu0 %514
    %v517 = vadd.f32 %v507, %v515
    %v518 = vtanh.pop %v517
    %520 = vrot.lane.b32.xlu0 %v518, 64
    %v521 = vpop.permute.xlu0 %520
    %v523 = vmul.f32 %v505, %v521
    %s524 = scalar_lea.vmem %s0, 6
    %v525 = vld [vmem:[%s524] sm:$0x3]
    %527 = vrot.lane.b32.xlu0 %v440, 32
    %v528 = vpop.permute.xlu0 %527
    %v529 = vsel %vm95, %v528, 0
    %531 = vmatpush.msra.mxu0 0.0
    %532 = vmatpush.msra.mxu0 0.0
    %533 = vmatpush.msra.mxu0 0.0
    %534 = vmatpush.msra.mxu0 0.0
    %535 = vmatpush.msra.mxu0 0.0
    %536 = vmatpush.msra.mxu0 0.0
    %537 = vmatpush.msra.mxu0 0.0
    %538 = vmatpush.msra.mxu0 0.0
    %539 = vmatpush.msra.mxu0 0.0
    %540 = vmatpush.msra.mxu0 0.0
    %541 = vmatpush.msra.mxu0 0.0
    %542 = vmatpush.msra.mxu0 0.0
    %543 = vmatpush.msra.mxu0 %v87
    %544 = vmatpush.msra.mxu0 %v86
    %545 = vmatpush.msra.mxu0 %v85
    %546 = vmatpush.msra.mxu0 %v84
    %547 = vmatmul.f32.gmra.mxu0 %v529
    %v548 = vpop.f32.mrf.mxu0
    %v549 = vadd.f32 0.0, %v548
    %550 = vdwg.mxu0
    %v552 = vsel %vm119, %v525, 0
    %554 = vmatpush.msra.mxu0 0.0
    %555 = vmatpush.msra.mxu0 0.0
    %556 = vmatpush.msra.mxu0 0.0
    %557 = vmatpush.msra.mxu0 0.0
    %558 = vmatpush.msra.mxu0 0.0
    %559 = vmatpush.msra.mxu0 0.0
    %560 = vmatpush.msra.mxu0 0.0
    %561 = vmatpush.msra.mxu0 0.0
    %562 = vmatpush.msra.mxu0 0.0
    %563 = vmatpush.msra.mxu0 0.0
    %564 = vmatpush.msra.mxu0 0.0
    %565 = vmatpush.msra.mxu0 0.0
    %566 = vmatpush.msra.mxu0 0.0
    %567 = vmatpush.msra.mxu0 0.0
    %568 = vmatpush.msra.mxu0 0.0
    %569 = vmatpush.msra.mxu0 %v79
    %570 = vmatmul.f32.gmra.mxu0 %v552
    %v571 = vpop.f32.mrf.mxu0
    %v572 = vadd.f32 %v549, %v571
    %573 = vdwg.mxu0
    %v574 = vadd.f32 %v572, %v144
    %v575 = vxor.u32 %v574, 2147483648
    %v576 = vmul.f32 %v575, 1.442695
    %v577 = vpow.pop %v576
    %v578 = vadd.f32 %v577, 1.0
    %v579 = vrcp.pop %v578
    %v580 = vmul.f32 %v578, %v579
    %v581 = vsub.f32 1.0, %v580
    %v582 = vmul.f32 %v579, %v581
    %v583 = vadd.f32 %v579, %v582
    %vm584 = vweird.f32 %v578
    %vm585 = vweird.f32 %v579
    %vm586 = vmor %vm584, %vm585
    %v587 = vsel %vm586, %v579, %v583
    %v588 = vand.u32 2147483647, %v578
    %vm589 = vcmp.eq.f32.partialorder %v588, 8.507059e+37
    %v590 = vand.u32 %v578, 2147483648
    %v591 = vor.u32 1.1754944e-38, %v590
    %v592 = vsel %vm589, %v591, %v587
    %v593 = vmul.f32 1.0, %v592
    %v594 = vtanh.pop %v574
    %v595 = vmul.f32 %v593, %v434
    %597 = vrot.lane.b32.xlu0 %v594, 64
    %v598 = vpop.permute.xlu0 %597
    %v600 = vmul.f32 %v593, %v598
    %602 = vrot.lane.b32.xlu0 %v600, 32
    %v603 = vpop.permute.xlu0 %602
    %v605 = vadd.f32 %v595, %v603
    %v606 = vtanh.pop %v605
    %608 = vrot.lane.b32.xlu0 %v606, 64
    %v609 = vpop.permute.xlu0 %608
    %v611 = vmul.f32 %v593, %v609
    %613 = vrot.lane.b32.xlu0 %v523, 32
    %v614 = vpop.permute.xlu0 %613
    %v615 = vsel %vm95, %v614, 0
    %617 = vmatpush.msra.mxu0 0.0
    %618 = vmatpush.msra.mxu0 0.0
    %619 = vmatpush.msra.mxu0 0.0
    %620 = vmatpush.msra.mxu0 0.0
    %621 = vmatpush.msra.mxu0 0.0
    %622 = vmatpush.msra.mxu0 0.0
    %623 = vmatpush.msra.mxu0 0.0
    %624 = vmatpush.msra.mxu0 0.0
    %625 = vmatpush.msra.mxu0 0.0
    %626 = vmatpush.msra.mxu0 0.0
    %627 = vmatpush.msra.mxu0 0.0
    %628 = vmatpush.msra.mxu0 0.0
    %629 = vmatpush.msra.mxu0 %v91
    %630 = vmatpush.msra.mxu0 %v90
    %631 = vmatpush.msra.mxu0 %v89
    %632 = vmatpush.msra.mxu0 %v88
    %633 = vmatmul.f32.gmra.mxu0 %v615
    %v634 = vpop.f32.mrf.mxu0
    %v635 = vadd.f32 0.0, %v634
    %636 = vdwg.mxu0
    %637 = vmatpush.msra.mxu0 0.0
    %638 = vmatpush.msra.mxu0 0.0
    %639 = vmatpush.msra.mxu0 0.0
    %640 = vmatpush.msra.mxu0 0.0
    %641 = vmatpush.msra.mxu0 0.0
    %642 = vmatpush.msra.mxu0 0.0
    %643 = vmatpush.msra.mxu0 0.0
    %644 = vmatpush.msra.mxu0 0.0
    %645 = vmatpush.msra.mxu0 0.0
    %646 = vmatpush.msra.mxu0 0.0
    %647 = vmatpush.msra.mxu0 0.0
    %648 = vmatpush.msra.mxu0 0.0
    %649 = vmatpush.msra.mxu0 %v83
    %650 = vmatpush.msra.mxu0 %v82
    %651 = vmatpush.msra.mxu0 %v81
    %652 = vmatpush.msra.mxu0 %v80
    %653 = vmatmul.f32.gmra.mxu0 %v529
    %v654 = vpop.f32.mrf.mxu0
    %v655 = vadd.f32 %v635, %v654
    %656 = vdwg.mxu0
    %v657 = vadd.f32 %v655, %v313
    %v658 = vxor.u32 %v657, 2147483648
    %v659 = vmul.f32 %v658, 1.442695
    %v660 = vpow.pop %v659
    %v661 = vadd.f32 %v660, 1.0
    %v662 = vrcp.pop %v661
    %v663 = vmul.f32 %v661, %v662
    %v664 = vsub.f32 1.0, %v663
    %v665 = vmul.f32 %v662, %v664
    %v666 = vadd.f32 %v662, %v665
    %vm667 = vweird.f32 %v661
    %vm668 = vweird.f32 %v662
    %vm669 = vmor %vm667, %vm668
    %v670 = vsel %vm669, %v662, %v666
    %v671 = vand.u32 2147483647, %v661
    %vm672 = vcmp.eq.f32.partialorder %v671, 8.507059e+37
    %v673 = vand.u32 %v661, 2147483648
    %v674 = vor.u32 1.1754944e-38, %v673
    %v675 = vsel %vm672, %v674, %v670
    %v676 = vmul.f32 1.0, %v675
    %v677 = vtanh.pop %v657
    %v678 = vmul.f32 %v676, %v517
    %680 = vrot.lane.b32.xlu0 %v677, 64
    %v681 = vpop.permute.xlu0 %680
    %v683 = vmul.f32 %v676, %v681
    %685 = vrot.lane.b32.xlu0 %v683, 32
    %v686 = vpop.permute.xlu0 %685
    %v688 = vadd.f32 %v678, %v686
    %v689 = vtanh.pop %v688
    %691 = vrot.lane.b32.xlu0 %v689, 64
    %v692 = vpop.permute.xlu0 %691
    %v694 = vmul.f32 %v676, %v692
    %s695 = scalar_lea.vmem %s0, 8
    %v696 = vld [vmem:[%s695] sm:$0x3]
    %698 = vrot.lane.b32.xlu0 %v611, 32
    %v699 = vpop.permute.xlu0 %698
    %v700 = vsel %vm95, %v699, 0
    %702 = vmatpush.msra.mxu0 0.0
    %703 = vmatpush.msra.mxu0 0.0
    %704 = vmatpush.msra.mxu0 0.0
    %705 = vmatpush.msra.mxu0 0.0
    %706 = vmatpush.msra.mxu0 0.0
    %707 = vmatpush.msra.mxu0 0.0
    %708 = vmatpush.msra.mxu0 0.0
    %709 = vmatpush.msra.mxu0 0.0
    %710 = vmatpush.msra.mxu0 0.0
    %711 = vmatpush.msra.mxu0 0.0
    %712 = vmatpush.msra.mxu0 0.0
    %713 = vmatpush.msra.mxu0 0.0
    %714 = vmatpush.msra.mxu0 %v87
    %715 = vmatpush.msra.mxu0 %v86
    %716 = vmatpush.msra.mxu0 %v85
    %717 = vmatpush.msra.mxu0 %v84
    %718 = vmatmul.f32.gmra.mxu0 %v700
    %v719 = vpop.f32.mrf.mxu0
    %v720 = vadd.f32 0.0, %v719
    %721 = vdwg.mxu0
    %v723 = vsel %vm119, %v696, 0
    %725 = vmatpush.msra.mxu0 0.0
    %726 = vmatpush.msra.mxu0 0.0
    %727 = vmatpush.msra.mxu0 0.0
    %728 = vmatpush.msra.mxu0 0.0
    %729 = vmatpush.msra.mxu0 0.0
    %730 = vmatpush.msra.mxu0 0.0
    %731 = vmatpush.msra.mxu0 0.0
    %732 = vmatpush.msra.mxu0 0.0
    %733 = vmatpush.msra.mxu0 0.0
    %734 = vmatpush.msra.mxu0 0.0
    %735 = vmatpush.msra.mxu0 0.0
    %736 = vmatpush.msra.mxu0 0.0
    %737 = vmatpush.msra.mxu0 0.0
    %738 = vmatpush.msra.mxu0 0.0
    %739 = vmatpush.msra.mxu0 0.0
    %740 = vmatpush.msra.mxu0 %v79
    %741 = vmatmul.f32.gmra.mxu0 %v723
    %v742 = vpop.f32.mrf.mxu0
    %v743 = vadd.f32 %v720, %v742
    %744 = vdwg.mxu0
    %v745 = vadd.f32 %v743, %v144
    %v746 = vxor.u32 %v745, 2147483648
    %v747 = vmul.f32 %v746, 1.442695
    %v748 = vpow.pop %v747
    %v749 = vadd.f32 %v748, 1.0
    %v750 = vrcp.pop %v749
    %v751 = vmul.f32 %v749, %v750
    %v752 = vsub.f32 1.0, %v751
    %v753 = vmul.f32 %v750, %v752
    %v754 = vadd.f32 %v750, %v753
    %vm755 = vweird.f32 %v749
    %vm756 = vweird.f32 %v750
    %vm757 = vmor %vm755, %vm756
    %v758 = vsel %vm757, %v750, %v754
    %v759 = vand.u32 2147483647, %v749
    %vm760 = vcmp.eq.f32.partialorder %v759, 8.507059e+37
    %v761 = vand.u32 %v749, 2147483648
    %v762 = vor.u32 1.1754944e-38, %v761
    %v763 = vsel %vm760, %v762, %v758
    %v764 = vmul.f32 1.0, %v763
    %v765 = vtanh.pop %v745
    %v766 = vmul.f32 %v764, %v605
    %768 = vrot.lane.b32.xlu0 %v765, 64
    %v769 = vpop.permute.xlu0 %768
    %v771 = vmul.f32 %v764, %v769
    %773 = vrot.lane.b32.xlu0 %v771, 32
    %v774 = vpop.permute.xlu0 %773
    %v776 = vadd.f32 %v766, %v774
    %v777 = vtanh.pop %v776
    %779 = vrot.lane.b32.xlu0 %v777, 64
    %v780 = vpop.permute.xlu0 %779
    %v782 = vmul.f32 %v764, %v780
    %784 = vrot.lane.b32.xlu0 %v694, 32
    %v785 = vpop.permute.xlu0 %784
    %v786 = vsel %vm95, %v785, 0
    %788 = vmatpush.msra.mxu0 0.0
    %789 = vmatpush.msra.mxu0 0.0
    %790 = vmatpush.msra.mxu0 0.0
    %791 = vmatpush.msra.mxu0 0.0
    %792 = vmatpush.msra.mxu0 0.0
    %793 = vmatpush.msra.mxu0 0.0
    %794 = vmatpush.msra.mxu0 0.0
    %795 = vmatpush.msra.mxu0 0.0
    %796 = vmatpush.msra.mxu0 0.0
    %797 = vmatpush.msra.mxu0 0.0
    %798 = vmatpush.msra.mxu0 0.0
    %799 = vmatpush.msra.mxu0 0.0
    %800 = vmatpush.msra.mxu0 %v91
    %801 = vmatpush.msra.mxu0 %v90
    %802 = vmatpush.msra.mxu0 %v89
    %803 = vmatpush.msra.mxu0 %v88
    %804 = vmatmul.f32.gmra.mxu0 %v786
    %v805 = vpop.f32.mrf.mxu0
    %v806 = vadd.f32 0.0, %v805
    %807 = vdwg.mxu0
    %808 = vmatpush.msra.mxu0 0.0
    %809 = vmatpush.msra.mxu0 0.0
    %810 = vmatpush.msra.mxu0 0.0
    %811 = vmatpush.msra.mxu0 0.0
    %812 = vmatpush.msra.mxu0 0.0
    %813 = vmatpush.msra.mxu0 0.0
    %814 = vmatpush.msra.mxu0 0.0
    %815 = vmatpush.msra.mxu0 0.0
    %816 = vmatpush.msra.mxu0 0.0
    %817 = vmatpush.msra.mxu0 0.0
    %818 = vmatpush.msra.mxu0 0.0
    %819 = vmatpush.msra.mxu0 0.0
    %820 = vmatpush.msra.mxu0 %v83
    %821 = vmatpush.msra.mxu0 %v82
    %822 = vmatpush.msra.mxu0 %v81
    %823 = vmatpush.msra.mxu0 %v80
    %824 = vmatmul.f32.gmra.mxu0 %v700
    %v825 = vpop.f32.mrf.mxu0
    %v826 = vadd.f32 %v806, %v825
    %827 = vdwg.mxu0
    %v828 = vadd.f32 %v826, %v313
    %v829 = vxor.u32 %v828, 2147483648
    %v830 = vmul.f32 %v829, 1.442695
    %v831 = vpow.pop %v830
    %v832 = vadd.f32 %v831, 1.0
    %v833 = vrcp.pop %v832
    %v834 = vmul.f32 %v832, %v833
    %v835 = vsub.f32 1.0, %v834
    %v836 = vmul.f32 %v833, %v835
    %v837 = vadd.f32 %v833, %v836
    %vm838 = vweird.f32 %v832
    %vm839 = vweird.f32 %v833
    %vm840 = vmor %vm838, %vm839
    %v841 = vsel %vm840, %v833, %v837
    %v842 = vand.u32 2147483647, %v832
    %vm843 = vcmp.eq.f32.partialorder %v842, 8.507059e+37
    %v844 = vand.u32 %v832, 2147483648
    %v845 = vor.u32 1.1754944e-38, %v844
    %v846 = vsel %vm843, %v845, %v841
    %v847 = vmul.f32 1.0, %v846
    %v848 = vtanh.pop %v828
    %v849 = vmul.f32 %v847, %v688
    %851 = vrot.lane.b32.xlu0 %v848, 64
    %v852 = vpop.permute.xlu0 %851
    %v854 = vmul.f32 %v847, %v852
    %856 = vrot.lane.b32.xlu0 %v854, 32
    %v857 = vpop.permute.xlu0 %856
    %v859 = vadd.f32 %v849, %v857
    %v860 = vtanh.pop %v859
    %862 = vrot.lane.b32.xlu0 %v860, 64
    %v863 = vpop.permute.xlu0 %862
    %v865 = vmul.f32 %v847, %v863
    %s866 = scalar_lea.vmem %s0, 10
    %v867 = vld [vmem:[%s866] sm:$0x3]
    %869 = vrot.lane.b32.xlu0 %v782, 32
    %v870 = vpop.permute.xlu0 %869
    %v871 = vsel %vm95, %v870, 0
    %873 = vmatpush.msra.mxu0 0.0
    %874 = vmatpush.msra.mxu0 0.0
    %875 = vmatpush.msra.mxu0 0.0
    %876 = vmatpush.msra.mxu0 0.0
    %877 = vmatpush.msra.mxu0 0.0
    %878 = vmatpush.msra.mxu0 0.0
    %879 = vmatpush.msra.mxu0 0.0
    %880 = vmatpush.msra.mxu0 0.0
    %881 = vmatpush.msra.mxu0 0.0
    %882 = vmatpush.msra.mxu0 0.0
    %883 = vmatpush.msra.mxu0 0.0
    %884 = vmatpush.msra.mxu0 0.0
    %885 = vmatpush.msra.mxu0 %v87
    %886 = vmatpush.msra.mxu0 %v86
    %887 = vmatpush.msra.mxu0 %v85
    %888 = vmatpush.msra.mxu0 %v84
    %889 = vmatmul.f32.gmra.mxu0 %v871
    %v890 = vpop.f32.mrf.mxu0
    %v891 = vadd.f32 0.0, %v890
    %892 = vdwg.mxu0
    %v894 = vsel %vm119, %v867, 0
    %896 = vmatpush.msra.mxu0 0.0
    %897 = vmatpush.msra.mxu0 0.0
    %898 = vmatpush.msra.mxu0 0.0
    %899 = vmatpush.msra.mxu0 0.0
    %900 = vmatpush.msra.mxu0 0.0
    %901 = vmatpush.msra.mxu0 0.0
    %902 = vmatpush.msra.mxu0 0.0
    %903 = vmatpush.msra.mxu0 0.0
    %904 = vmatpush.msra.mxu0 0.0
    %905 = vmatpush.msra.mxu0 0.0
    %906 = vmatpush.msra.mxu0 0.0
    %907 = vmatpush.msra.mxu0 0.0
    %908 = vmatpush.msra.mxu0 0.0
    %909 = vmatpush.msra.mxu0 0.0
    %910 = vmatpush.msra.mxu0 0.0
    %911 = vmatpush.msra.mxu0 %v79
    %912 = vmatmul.f32.gmra.mxu0 %v894
    %v913 = vpop.f32.mrf.mxu0
    %v914 = vadd.f32 %v891, %v913
    %915 = vdwg.mxu0
    %v916 = vadd.f32 %v914, %v144
    %v917 = vxor.u32 %v916, 2147483648
    %v918 = vmul.f32 %v917, 1.442695
    %v919 = vpow.pop %v918
    %v920 = vadd.f32 %v919, 1.0
    %v921 = vrcp.pop %v920
    %v922 = vmul.f32 %v920, %v921
    %v923 = vsub.f32 1.0, %v922
    %v924 = vmul.f32 %v921, %v923
    %v925 = vadd.f32 %v921, %v924
    %vm926 = vweird.f32 %v920
    %vm927 = vweird.f32 %v921
    %vm928 = vmor %vm926, %vm927
    %v929 = vsel %vm928, %v921, %v925
    %v930 = vand.u32 2147483647, %v920
    %vm931 = vcmp.eq.f32.partialorder %v930, 8.507059e+37
    %v932 = vand.u32 %v920, 2147483648
    %v933 = vor.u32 1.1754944e-38, %v932
    %v934 = vsel %vm931, %v933, %v929
    %v935 = vmul.f32 1.0, %v934
    %v936 = vtanh.pop %v916
    %v937 = vmul.f32 %v935, %v776
    %939 = vrot.lane.b32.xlu0 %v936, 64
    %v940 = vpop.permute.xlu0 %939
    %v942 = vmul.f32 %v935, %v940
    %944 = vrot.lane.b32.xlu0 %v942, 32
    %v945 = vpop.permute.xlu0 %944
    %v947 = vadd.f32 %v937, %v945
    %v948 = vtanh.pop %v947
    %950 = vrot.lane.b32.xlu0 %v948, 64
    %v951 = vpop.permute.xlu0 %950
    %v953 = vmul.f32 %v935, %v951
    %955 = vrot.lane.b32.xlu0 %v865, 32
    %v956 = vpop.permute.xlu0 %955
    %v957 = vsel %vm95, %v956, 0
    %959 = vmatpush.msra.mxu0 0.0
    %960 = vmatpush.msra.mxu0 0.0
    %961 = vmatpush.msra.mxu0 0.0
    %962 = vmatpush.msra.mxu0 0.0
    %963 = vmatpush.msra.mxu0 0.0
    %964 = vmatpush.msra.mxu0 0.0
    %965 = vmatpush.msra.mxu0 0.0
    %966 = vmatpush.msra.mxu0 0.0
    %967 = vmatpush.msra.mxu0 0.0
    %968 = vmatpush.msra.mxu0 0.0
    %969 = vmatpush.msra.mxu0 0.0
    %970 = vmatpush.msra.mxu0 0.0
    %971 = vmatpush.msra.mxu0 %v91
    %972 = vmatpush.msra.mxu0 %v90
    %973 = vmatpush.msra.mxu0 %v89
    %974 = vmatpush.msra.mxu0 %v88
    %975 = vmatmul.f32.gmra.mxu0 %v957
    %v976 = vpop.f32.mrf.mxu0
    %v977 = vadd.f32 0.0, %v976
    %978 = vdwg.mxu0
    %979 = vmatpush.msra.mxu0 0.0
    %980 = vmatpush.msra.mxu0 0.0
    %981 = vmatpush.msra.mxu0 0.0
    %982 = vmatpush.msra.mxu0 0.0
    %983 = vmatpush.msra.mxu0 0.0
    %984 = vmatpush.msra.mxu0 0.0
    %985 = vmatpush.msra.mxu0 0.0
    %986 = vmatpush.msra.mxu0 0.0
    %987 = vmatpush.msra.mxu0 0.0
    %988 = vmatpush.msra.mxu0 0.0
    %989 = vmatpush.msra.mxu0 0.0
    %990 = vmatpush.msra.mxu0 0.0
    %991 = vmatpush.msra.mxu0 %v83
    %992 = vmatpush.msra.mxu0 %v82
    %993 = vmatpush.msra.mxu0 %v81
    %994 = vmatpush.msra.mxu0 %v80
    %995 = vmatmul.f32.gmra.mxu0 %v871
    %v996 = vpop.f32.mrf.mxu0
    %v997 = vadd.f32 %v977, %v996
    %998 = vdwg.mxu0
    %v999 = vadd.f32 %v997, %v313
    %v1000 = vxor.u32 %v999, 2147483648
    %v1001 = vmul.f32 %v1000, 1.442695
    %v1002 = vpow.pop %v1001
    %v1003 = vadd.f32 %v1002, 1.0
    %v1004 = vrcp.pop %v1003
    %v1005 = vmul.f32 %v1003, %v1004
    %v1006 = vsub.f32 1.0, %v1005
    %v1007 = vmul.f32 %v1004, %v1006
    %v1008 = vadd.f32 %v1004, %v1007
    %vm1009 = vweird.f32 %v1003
    %vm1010 = vweird.f32 %v1004
    %vm1011 = vmor %vm1009, %vm1010
    %v1012 = vsel %vm1011, %v1004, %v1008
    %v1013 = vand.u32 2147483647, %v1003
    %vm1014 = vcmp.eq.f32.partialorder %v1013, 8.507059e+37
    %v1015 = vand.u32 %v1003, 2147483648
    %v1016 = vor.u32 1.1754944e-38, %v1015
    %v1017 = vsel %vm1014, %v1016, %v1012
    %v1018 = vmul.f32 1.0, %v1017
    %v1019 = vtanh.pop %v999
    %v1020 = vmul.f32 %v1018, %v859
    %1022 = vrot.lane.b32.xlu0 %v1019, 64
    %v1023 = vpop.permute.xlu0 %1022
    %v1025 = vmul.f32 %v1018, %v1023
    %1027 = vrot.lane.b32.xlu0 %v1025, 32
    %v1028 = vpop.permute.xlu0 %1027
    %v1030 = vadd.f32 %v1020, %v1028
    %v1031 = vtanh.pop %v1030
    %1033 = vrot.lane.b32.xlu0 %v1031, 64
    %v1034 = vpop.permute.xlu0 %1033
    %v1036 = vmul.f32 %v1018, %v1034
    %s1037 = scalar_lea.vmem %s0, 12
    %v1038 = vld [vmem:[%s1037] sm:$0x3]
    %1040 = vrot.lane.b32.xlu0 %v953, 32
    %v1041 = vpop.permute.xlu0 %1040
    %v1042 = vsel %vm95, %v1041, 0
    %1044 = vmatpush.msra.mxu0 0.0
    %1045 = vmatpush.msra.mxu0 0.0
    %1046 = vmatpush.msra.mxu0 0.0
    %1047 = vmatpush.msra.mxu0 0.0
    %1048 = vmatpush.msra.mxu0 0.0
    %1049 = vmatpush.msra.mxu0 0.0
    %1050 = vmatpush.msra.mxu0 0.0
    %1051 = vmatpush.msra.mxu0 0.0
    %1052 = vmatpush.msra.mxu0 0.0
    %1053 = vmatpush.msra.mxu0 0.0
    %1054 = vmatpush.msra.mxu0 0.0
    %1055 = vmatpush.msra.mxu0 0.0
    %1056 = vmatpush.msra.mxu0 %v87
    %1057 = vmatpush.msra.mxu0 %v86
    %1058 = vmatpush.msra.mxu0 %v85
    %1059 = vmatpush.msra.mxu0 %v84
    %1060 = vmatmul.f32.gmra.mxu0 %v1042
    %v1061 = vpop.f32.mrf.mxu0
    %v1062 = vadd.f32 0.0, %v1061
    %1063 = vdwg.mxu0
    %v1065 = vsel %vm119, %v1038, 0
    %1067 = vmatpush.msra.mxu0 0.0
    %1068 = vmatpush.msra.mxu0 0.0
    %1069 = vmatpush.msra.mxu0 0.0
    %1070 = vmatpush.msra.mxu0 0.0
    %1071 = vmatpush.msra.mxu0 0.0
    %1072 = vmatpush.msra.mxu0 0.0
    %1073 = vmatpush.msra.mxu0 0.0
    %1074 = vmatpush.msra.mxu0 0.0
    %1075 = vmatpush.msra.mxu0 0.0
    %1076 = vmatpush.msra.mxu0 0.0
    %1077 = vmatpush.msra.mxu0 0.0
    %1078 = vmatpush.msra.mxu0 0.0
    %1079 = vmatpush.msra.mxu0 0.0
    %1080 = vmatpush.msra.mxu0 0.0
    %1081 = vmatpush.msra.mxu0 0.0
    %1082 = vmatpush.msra.mxu0 %v79
    %1083 = vmatmul.f32.gmra.mxu0 %v1065
    %v1084 = vpop.f32.mrf.mxu0
    %v1085 = vadd.f32 %v1062, %v1084
    %1086 = vdwg.mxu0
    %v1087 = vadd.f32 %v1085, %v144
    %v1088 = vxor.u32 %v1087, 2147483648
    %v1089 = vmul.f32 %v1088, 1.442695
    %v1090 = vpow.pop %v1089
    %v1091 = vadd.f32 %v1090, 1.0
    %v1092 = vrcp.pop %v1091
    %v1093 = vmul.f32 %v1091, %v1092
    %v1094 = vsub.f32 1.0, %v1093
    %v1095 = vmul.f32 %v1092, %v1094
    %v1096 = vadd.f32 %v1092, %v1095
    %vm1097 = vweird.f32 %v1091
    %vm1098 = vweird.f32 %v1092
    %vm1099 = vmor %vm1097, %vm1098
    %v1100 = vsel %vm1099, %v1092, %v1096
    %v1101 = vand.u32 2147483647, %v1091
    %vm1102 = vcmp.eq.f32.partialorder %v1101, 8.507059e+37
    %v1103 = vand.u32 %v1091, 2147483648
    %v1104 = vor.u32 1.1754944e-38, %v1103
    %v1105 = vsel %vm1102, %v1104, %v1100
    %v1106 = vmul.f32 1.0, %v1105
    %v1107 = vtanh.pop %v1087
    %v1108 = vmul.f32 %v1106, %v947
    %1110 = vrot.lane.b32.xlu0 %v1107, 64
    %v1111 = vpop.permute.xlu0 %1110
    %v1113 = vmul.f32 %v1106, %v1111
    %1115 = vrot.lane.b32.xlu0 %v1113, 32
    %v1116 = vpop.permute.xlu0 %1115
    %v1118 = vadd.f32 %v1108, %v1116
    %v1119 = vtanh.pop %v1118
    %1121 = vrot.lane.b32.xlu0 %v1119, 64
    %v1122 = vpop.permute.xlu0 %1121
    %v1124 = vmul.f32 %v1106, %v1122
    %1126 = vrot.lane.b32.xlu0 %v1036, 32
    %v1127 = vpop.permute.xlu0 %1126
    %v1128 = vsel %vm95, %v1127, 0
    %1130 = vmatpush.msra.mxu0 0.0
    %1131 = vmatpush.msra.mxu0 0.0
    %1132 = vmatpush.msra.mxu0 0.0
    %1133 = vmatpush.msra.mxu0 0.0
    %1134 = vmatpush.msra.mxu0 0.0
    %1135 = vmatpush.msra.mxu0 0.0
    %1136 = vmatpush.msra.mxu0 0.0
    %1137 = vmatpush.msra.mxu0 0.0
    %1138 = vmatpush.msra.mxu0 0.0
    %1139 = vmatpush.msra.mxu0 0.0
    %1140 = vmatpush.msra.mxu0 0.0
    %1141 = vmatpush.msra.mxu0 0.0
    %1142 = vmatpush.msra.mxu0 %v91
    %1143 = vmatpush.msra.mxu0 %v90
    %1144 = vmatpush.msra.mxu0 %v89
    %1145 = vmatpush.msra.mxu0 %v88
    %1146 = vmatmul.f32.gmra.mxu0 %v1128
    %v1147 = vpop.f32.mrf.mxu0
    %v1148 = vadd.f32 0.0, %v1147
    %1149 = vdwg.mxu0
    %1150 = vmatpush.msra.mxu0 0.0
    %1151 = vmatpush.msra.mxu0 0.0
    %1152 = vmatpush.msra.mxu0 0.0
    %1153 = vmatpush.msra.mxu0 0.0
    %1154 = vmatpush.msra.mxu0 0.0
    %1155 = vmatpush.msra.mxu0 0.0
    %1156 = vmatpush.msra.mxu0 0.0
    %1157 = vmatpush.msra.mxu0 0.0
    %1158 = vmatpush.msra.mxu0 0.0
    %1159 = vmatpush.msra.mxu0 0.0
    %1160 = vmatpush.msra.mxu0 0.0
    %1161 = vmatpush.msra.mxu0 0.0
    %1162 = vmatpush.msra.mxu0 %v83
    %1163 = vmatpush.msra.mxu0 %v82
    %1164 = vmatpush.msra.mxu0 %v81
    %1165 = vmatpush.msra.mxu0 %v80
    %1166 = vmatmul.f32.gmra.mxu0 %v1042
    %v1167 = vpop.f32.mrf.mxu0
    %v1168 = vadd.f32 %v1148, %v1167
    %1169 = vdwg.mxu0
    %v1170 = vadd.f32 %v1168, %v313
    %v1171 = vxor.u32 %v1170, 2147483648
    %v1172 = vmul.f32 %v1171, 1.442695
    %v1173 = vpow.pop %v1172
    %v1174 = vadd.f32 %v1173, 1.0
    %v1175 = vrcp.pop %v1174
    %v1176 = vmul.f32 %v1174, %v1175
    %v1177 = vsub.f32 1.0, %v1176
    %v1178 = vmul.f32 %v1175, %v1177
    %v1179 = vadd.f32 %v1175, %v1178
    %vm1180 = vweird.f32 %v1174
    %vm1181 = vweird.f32 %v1175
    %vm1182 = vmor %vm1180, %vm1181
    %v1183 = vsel %vm1182, %v1175, %v1179
    %v1184 = vand.u32 2147483647, %v1174
    %vm1185 = vcmp.eq.f32.partialorder %v1184, 8.507059e+37
    %v1186 = vand.u32 %v1174, 2147483648
    %v1187 = vor.u32 1.1754944e-38, %v1186
    %v1188 = vsel %vm1185, %v1187, %v1183
    %v1189 = vmul.f32 1.0, %v1188
    %v1190 = vtanh.pop %v1170
    %v1191 = vmul.f32 %v1189, %v1030
    %1193 = vrot.lane.b32.xlu0 %v1190, 64
    %v1194 = vpop.permute.xlu0 %1193
    %v1196 = vmul.f32 %v1189, %v1194
    %1198 = vrot.lane.b32.xlu0 %v1196, 32
    %v1199 = vpop.permute.xlu0 %1198
    %v1201 = vadd.f32 %v1191, %v1199
    %v1202 = vtanh.pop %v1201
    %1204 = vrot.lane.b32.xlu0 %v1202, 64
    %v1205 = vpop.permute.xlu0 %1204
    %v1207 = vmul.f32 %v1189, %v1205
    %s1208 = scalar_lea.vmem %s0, 14
    %v1209 = vld [vmem:[%s1208] sm:$0x3]
    %1211 = vrot.lane.b32.xlu0 %v1124, 32
    %v1212 = vpop.permute.xlu0 %1211
    %v1213 = vsel %vm95, %v1212, 0
    %1215 = vmatpush.msra.mxu0 0.0
    %1216 = vmatpush.msra.mxu0 0.0
    %1217 = vmatpush.msra.mxu0 0.0
    %1218 = vmatpush.msra.mxu0 0.0
    %1219 = vmatpush.msra.mxu0 0.0
    %1220 = vmatpush.msra.mxu0 0.0
    %1221 = vmatpush.msra.mxu0 0.0
    %1222 = vmatpush.msra.mxu0 0.0
    %1223 = vmatpush.msra.mxu0 0.0
    %1224 = vmatpush.msra.mxu0 0.0
    %1225 = vmatpush.msra.mxu0 0.0
    %1226 = vmatpush.msra.mxu0 0.0
    %1227 = vmatpush.msra.mxu0 %v87
    %1228 = vmatpush.msra.mxu0 %v86
    %1229 = vmatpush.msra.mxu0 %v85
    %1230 = vmatpush.msra.mxu0 %v84
    %1231 = vmatmul.f32.gmra.mxu0 %v1213
    %v1232 = vpop.f32.mrf.mxu0
    %v1233 = vadd.f32 0.0, %v1232
    %1234 = vdwg.mxu0
    %v1236 = vsel %vm119, %v1209, 0
    %1238 = vmatpush.msra.mxu0 0.0
    %1239 = vmatpush.msra.mxu0 0.0
    %1240 = vmatpush.msra.mxu0 0.0
    %1241 = vmatpush.msra.mxu0 0.0
    %1242 = vmatpush.msra.mxu0 0.0
    %1243 = vmatpush.msra.mxu0 0.0
    %1244 = vmatpush.msra.mxu0 0.0
    %1245 = vmatpush.msra.mxu0 0.0
    %1246 = vmatpush.msra.mxu0 0.0
    %1247 = vmatpush.msra.mxu0 0.0
    %1248 = vmatpush.msra.mxu0 0.0
    %1249 = vmatpush.msra.mxu0 0.0
    %1250 = vmatpush.msra.mxu0 0.0
    %1251 = vmatpush.msra.mxu0 0.0
    %1252 = vmatpush.msra.mxu0 0.0
    %1253 = vmatpush.msra.mxu0 %v79
    %1254 = vmatmul.f32.gmra.mxu0 %v1236
    %v1255 = vpop.f32.mrf.mxu0
    %v1256 = vadd.f32 %v1233, %v1255
    %1257 = vdwg.mxu0
    %v1258 = vadd.f32 %v1256, %v144
    %v1259 = vxor.u32 %v1258, 2147483648
    %v1260 = vmul.f32 %v1259, 1.442695
    %v1261 = vpow.pop %v1260
    %v1262 = vadd.f32 %v1261, 1.0
    %v1263 = vrcp.pop %v1262
    %v1264 = vmul.f32 %v1262, %v1263
    %v1265 = vsub.f32 1.0, %v1264
    %v1266 = vmul.f32 %v1263, %v1265
    %v1267 = vadd.f32 %v1263, %v1266
    %vm1268 = vweird.f32 %v1262
    %vm1269 = vweird.f32 %v1263
    %vm1270 = vmor %vm1268, %vm1269
    %v1271 = vsel %vm1270, %v1263, %v1267
    %v1272 = vand.u32 2147483647, %v1262
    %vm1273 = vcmp.eq.f32.partialorder %v1272, 8.507059e+37
    %v1274 = vand.u32 %v1262, 2147483648
    %v1275 = vor.u32 1.1754944e-38, %v1274
    %v1276 = vsel %vm1273, %v1275, %v1271
    %v1277 = vmul.f32 1.0, %v1276
    %v1278 = vtanh.pop %v1258
    %v1279 = vmul.f32 %v1277, %v1118
    %1281 = vrot.lane.b32.xlu0 %v1278, 64
    %v1282 = vpop.permute.xlu0 %1281
    %v1284 = vmul.f32 %v1277, %v1282
    %1286 = vrot.lane.b32.xlu0 %v1284, 32
    %v1287 = vpop.permute.xlu0 %1286
    %v1289 = vadd.f32 %v1279, %v1287
    %v1290 = vtanh.pop %v1289
    %1292 = vrot.lane.b32.xlu0 %v1290, 64
    %v1293 = vpop.permute.xlu0 %1292
    %v1295 = vmul.f32 %v1277, %v1293
    %1297 = vrot.lane.b32.xlu0 %v1207, 32
    %v1298 = vpop.permute.xlu0 %1297
    %v1299 = vsel %vm95, %v1298, 0
    %1301 = vmatpush.msra.mxu0 0.0
    %1302 = vmatpush.msra.mxu0 0.0
    %1303 = vmatpush.msra.mxu0 0.0
    %1304 = vmatpush.msra.mxu0 0.0
    %1305 = vmatpush.msra.mxu0 0.0
    %1306 = vmatpush.msra.mxu0 0.0
    %1307 = vmatpush.msra.mxu0 0.0
    %1308 = vmatpush.msra.mxu0 0.0
    %1309 = vmatpush.msra.mxu0 0.0
    %1310 = vmatpush.msra.mxu0 0.0
    %1311 = vmatpush.msra.mxu0 0.0
    %1312 = vmatpush.msra.mxu0 0.0
    %1313 = vmatpush.msra.mxu0 %v91
    %1314 = vmatpush.msra.mxu0 %v90
    %1315 = vmatpush.msra.mxu0 %v89
    %1316 = vmatpush.msra.mxu0 %v88
    %1317 = vmatmul.f32.gmra.mxu0 %v1299
    %v1318 = vpop.f32.mrf.mxu0
    %v1319 = vadd.f32 0.0, %v1318
    %1320 = vdwg.mxu0
    %1321 = vmatpush.msra.mxu0 0.0
    %1322 = vmatpush.msra.mxu0 0.0
    %1323 = vmatpush.msra.mxu0 0.0
    %1324 = vmatpush.msra.mxu0 0.0
    %1325 = vmatpush.msra.mxu0 0.0
    %1326 = vmatpush.msra.mxu0 0.0
    %1327 = vmatpush.msra.mxu0 0.0
    %1328 = vmatpush.msra.mxu0 0.0
    %1329 = vmatpush.msra.mxu0 0.0
    %1330 = vmatpush.msra.mxu0 0.0
    %1331 = vmatpush.msra.mxu0 0.0
    %1332 = vmatpush.msra.mxu0 0.0
    %1333 = vmatpush.msra.mxu0 %v83
    %1334 = vmatpush.msra.mxu0 %v82
    %1335 = vmatpush.msra.mxu0 %v81
    %1336 = vmatpush.msra.mxu0 %v80
    %1337 = vmatmul.f32.gmra.mxu0 %v1213
    %v1338 = vpop.f32.mrf.mxu0
    %v1339 = vadd.f32 %v1319, %v1338
    %1340 = vdwg.mxu0
    %v1341 = vadd.f32 %v1339, %v313
    %v1342 = vxor.u32 %v1341, 2147483648
    %v1343 = vmul.f32 %v1342, 1.442695
    %v1344 = vpow.pop %v1343
    %v1345 = vadd.f32 %v1344, 1.0
    %v1346 = vrcp.pop %v1345
    %v1347 = vmul.f32 %v1345, %v1346
    %v1348 = vsub.f32 1.0, %v1347
    %v1349 = vmul.f32 %v1346, %v1348
    %v1350 = vadd.f32 %v1346, %v1349
    %vm1351 = vweird.f32 %v1345
    %vm1352 = vweird.f32 %v1346
    %vm1353 = vmor %vm1351, %vm1352
    %v1354 = vsel %vm1353, %v1346, %v1350
    %v1355 = vand.u32 2147483647, %v1345
    %vm1356 = vcmp.eq.f32.partialorder %v1355, 8.507059e+37
    %v1357 = vand.u32 %v1345, 2147483648
    %v1358 = vor.u32 1.1754944e-38, %v1357
    %v1359 = vsel %vm1356, %v1358, %v1354
    %v1360 = vmul.f32 1.0, %v1359
    %v1361 = vtanh.pop %v1341
    %v1362 = vmul.f32 %v1360, %v1201
    %1364 = vrot.lane.b32.xlu0 %v1361, 64
    %v1365 = vpop.permute.xlu0 %1364
    %v1367 = vmul.f32 %v1360, %v1365
    %1369 = vrot.lane.b32.xlu0 %v1367, 32
    %v1370 = vpop.permute.xlu0 %1369
    %v1372 = vadd.f32 %v1362, %v1370
    %v1373 = vtanh.pop %v1372
    %1375 = vrot.lane.b32.xlu0 %v1373, 64
    %v1376 = vpop.permute.xlu0 %1375
    %v1378 = vmul.f32 %v1360, %v1376
    %s1379 = scalar_lea.vmem %s0, 16
    %v1380 = vld [vmem:[%s1379] sm:$0x3]
    %1382 = vrot.lane.b32.xlu0 %v1295, 32
    %v1383 = vpop.permute.xlu0 %1382
    %v1384 = vsel %vm95, %v1383, 0
    %1386 = vmatpush.msra.mxu0 0.0
    %1387 = vmatpush.msra.mxu0 0.0
    %1388 = vmatpush.msra.mxu0 0.0
    %1389 = vmatpush.msra.mxu0 0.0
    %1390 = vmatpush.msra.mxu0 0.0
    %1391 = vmatpush.msra.mxu0 0.0
    %1392 = vmatpush.msra.mxu0 0.0
    %1393 = vmatpush.msra.mxu0 0.0
    %1394 = vmatpush.msra.mxu0 0.0
    %1395 = vmatpush.msra.mxu0 0.0
    %1396 = vmatpush.msra.mxu0 0.0
    %1397 = vmatpush.msra.mxu0 0.0
    %1398 = vmatpush.msra.mxu0 %v87
    %1399 = vmatpush.msra.mxu0 %v86
    %1400 = vmatpush.msra.mxu0 %v85
    %1401 = vmatpush.msra.mxu0 %v84
    %1402 = vmatmul.f32.gmra.mxu0 %v1384
    %v1403 = vpop.f32.mrf.mxu0
    %v1404 = vadd.f32 0.0, %v1403
    %1405 = vdwg.mxu0
    %v1407 = vsel %vm119, %v1380, 0
    %1409 = vmatpush.msra.mxu0 0.0
    %1410 = vmatpush.msra.mxu0 0.0
    %1411 = vmatpush.msra.mxu0 0.0
    %1412 = vmatpush.msra.mxu0 0.0
    %1413 = vmatpush.msra.mxu0 0.0
    %1414 = vmatpush.msra.mxu0 0.0
    %1415 = vmatpush.msra.mxu0 0.0
    %1416 = vmatpush.msra.mxu0 0.0
    %1417 = vmatpush.msra.mxu0 0.0
    %1418 = vmatpush.msra.mxu0 0.0
    %1419 = vmatpush.msra.mxu0 0.0
    %1420 = vmatpush.msra.mxu0 0.0
    %1421 = vmatpush.msra.mxu0 0.0
    %1422 = vmatpush.msra.mxu0 0.0
    %1423 = vmatpush.msra.mxu0 0.0
    %1424 = vmatpush.msra.mxu0 %v79
    %1425 = vmatmul.f32.gmra.mxu0 %v1407
    %v1426 = vpop.f32.mrf.mxu0
    %v1427 = vadd.f32 %v1404, %v1426
    %1428 = vdwg.mxu0
    %v1429 = vadd.f32 %v1427, %v144
    %v1430 = vxor.u32 %v1429, 2147483648
    %v1431 = vmul.f32 %v1430, 1.442695
    %v1432 = vpow.pop %v1431
    %v1433 = vadd.f32 %v1432, 1.0
    %v1434 = vrcp.pop %v1433
    %v1435 = vmul.f32 %v1433, %v1434
    %v1436 = vsub.f32 1.0, %v1435
    %v1437 = vmul.f32 %v1434, %v1436
    %v1438 = vadd.f32 %v1434, %v1437
    %vm1439 = vweird.f32 %v1433
    %vm1440 = vweird.f32 %v1434
    %vm1441 = vmor %vm1439, %vm1440
    %v1442 = vsel %vm1441, %v1434, %v1438
    %v1443 = vand.u32 2147483647, %v1433
    %vm1444 = vcmp.eq.f32.partialorder %v1443, 8.507059e+37
    %v1445 = vand.u32 %v1433, 2147483648
    %v1446 = vor.u32 1.1754944e-38, %v1445
    %v1447 = vsel %vm1444, %v1446, %v1442
    %v1448 = vmul.f32 1.0, %v1447
    %v1449 = vtanh.pop %v1429
    %v1450 = vmul.f32 %v1448, %v1289
    %1452 = vrot.lane.b32.xlu0 %v1449, 64
    %v1453 = vpop.permute.xlu0 %1452
    %v1455 = vmul.f32 %v1448, %v1453
    %1457 = vrot.lane.b32.xlu0 %v1455, 32
    %v1458 = vpop.permute.xlu0 %1457
    %v1460 = vadd.f32 %v1450, %v1458
    %v1461 = vtanh.pop %v1460
    %1463 = vrot.lane.b32.xlu0 %v1461, 64
    %v1464 = vpop.permute.xlu0 %1463
    %v1466 = vmul.f32 %v1448, %v1464
    %1468 = vrot.lane.b32.xlu0 %v1378, 32
    %v1469 = vpop.permute.xlu0 %1468
    %v1470 = vsel %vm95, %v1469, 0
    %1472 = vmatpush.msra.mxu0 0.0
    %1473 = vmatpush.msra.mxu0 0.0
    %1474 = vmatpush.msra.mxu0 0.0
    %1475 = vmatpush.msra.mxu0 0.0
    %1476 = vmatpush.msra.mxu0 0.0
    %1477 = vmatpush.msra.mxu0 0.0
    %1478 = vmatpush.msra.mxu0 0.0
    %1479 = vmatpush.msra.mxu0 0.0
    %1480 = vmatpush.msra.mxu0 0.0
    %1481 = vmatpush.msra.mxu0 0.0
    %1482 = vmatpush.msra.mxu0 0.0
    %1483 = vmatpush.msra.mxu0 0.0
    %1484 = vmatpush.msra.mxu0 %v91
    %1485 = vmatpush.msra.mxu0 %v90
    %1486 = vmatpush.msra.mxu0 %v89
    %1487 = vmatpush.msra.mxu0 %v88
    %1488 = vmatmul.f32.gmra.mxu0 %v1470
    %v1489 = vpop.f32.mrf.mxu0
    %v1490 = vadd.f32 0.0, %v1489
    %1491 = vdwg.mxu0
    %1492 = vmatpush.msra.mxu0 0.0
    %1493 = vmatpush.msra.mxu0 0.0
    %1494 = vmatpush.msra.mxu0 0.0
    %1495 = vmatpush.msra.mxu0 0.0
    %1496 = vmatpush.msra.mxu0 0.0
    %1497 = vmatpush.msra.mxu0 0.0
    %1498 = vmatpush.msra.mxu0 0.0
    %1499 = vmatpush.msra.mxu0 0.0
    %1500 = vmatpush.msra.mxu0 0.0
    %1501 = vmatpush.msra.mxu0 0.0
    %1502 = vmatpush.msra.mxu0 0.0
    %1503 = vmatpush.msra.mxu0 0.0
    %1504 = vmatpush.msra.mxu0 %v83
    %1505 = vmatpush.msra.mxu0 %v82
    %1506 = vmatpush.msra.mxu0 %v81
    %1507 = vmatpush.msra.mxu0 %v80
    %1508 = vmatmul.f32.gmra.mxu0 %v1384
    %v1509 = vpop.f32.mrf.mxu0
    %v1510 = vadd.f32 %v1490, %v1509
    %1511 = vdwg.mxu0
    %v1512 = vadd.f32 %v1510, %v313
    %v1513 = vxor.u32 %v1512, 2147483648
    %v1514 = vmul.f32 %v1513, 1.442695
    %v1515 = vpow.pop %v1514
    %v1516 = vadd.f32 %v1515, 1.0
    %v1517 = vrcp.pop %v1516
    %v1518 = vmul.f32 %v1516, %v1517
    %v1519 = vsub.f32 1.0, %v1518
    %v1520 = vmul.f32 %v1517, %v1519
    %v1521 = vadd.f32 %v1517, %v1520
    %vm1522 = vweird.f32 %v1516
    %vm1523 = vweird.f32 %v1517
    %vm1524 = vmor %vm1522, %vm1523
    %v1525 = vsel %vm1524, %v1517, %v1521
    %v1526 = vand.u32 2147483647, %v1516
    %vm1527 = vcmp.eq.f32.partialorder %v1526, 8.507059e+37
    %v1528 = vand.u32 %v1516, 2147483648
    %v1529 = vor.u32 1.1754944e-38, %v1528
    %v1530 = vsel %vm1527, %v1529, %v1525
    %v1531 = vmul.f32 1.0, %v1530
    %v1532 = vtanh.pop %v1512
    %v1533 = vmul.f32 %v1531, %v1372
    %1535 = vrot.lane.b32.xlu0 %v1532, 64
    %v1536 = vpop.permute.xlu0 %1535
    %v1538 = vmul.f32 %v1531, %v1536
    %1540 = vrot.lane.b32.xlu0 %v1538, 32
    %v1541 = vpop.permute.xlu0 %1540
    %v1543 = vadd.f32 %v1533, %v1541
    %v1544 = vtanh.pop %v1543
    %1546 = vrot.lane.b32.xlu0 %v1544, 64
    %v1547 = vpop.permute.xlu0 %1546
    %v1549 = vmul.f32 %v1531, %v1547
    %s1550 = scalar_lea.vmem %s0, 18
    %v1551 = vld [vmem:[%s1550] sm:$0x3]
    %1553 = vrot.lane.b32.xlu0 %v1466, 32
    %v1554 = vpop.permute.xlu0 %1553
    %v1555 = vsel %vm95, %v1554, 0
    %1557 = vmatpush.msra.mxu0 0.0
    %1558 = vmatpush.msra.mxu0 0.0
    %1559 = vmatpush.msra.mxu0 0.0
    %1560 = vmatpush.msra.mxu0 0.0
    %1561 = vmatpush.msra.mxu0 0.0
    %1562 = vmatpush.msra.mxu0 0.0
    %1563 = vmatpush.msra.mxu0 0.0
    %1564 = vmatpush.msra.mxu0 0.0
    %1565 = vmatpush.msra.mxu0 0.0
    %1566 = vmatpush.msra.mxu0 0.0
    %1567 = vmatpush.msra.mxu0 0.0
    %1568 = vmatpush.msra.mxu0 0.0
    %1569 = vmatpush.msra.mxu0 %v87
    %1570 = vmatpush.msra.mxu0 %v86
    %1571 = vmatpush.msra.mxu0 %v85
    %1572 = vmatpush.msra.mxu0 %v84
    %1573 = vmatmul.f32.gmra.mxu0 %v1555
    %v1574 = vpop.f32.mrf.mxu0
    %v1575 = vadd.f32 0.0, %v1574
    %1576 = vdwg.mxu0
    %v1578 = vsel %vm119, %v1551, 0
    %1580 = vmatpush.msra.mxu0 0.0
    %1581 = vmatpush.msra.mxu0 0.0
    %1582 = vmatpush.msra.mxu0 0.0
    %1583 = vmatpush.msra.mxu0 0.0
    %1584 = vmatpush.msra.mxu0 0.0
    %1585 = vmatpush.msra.mxu0 0.0
    %1586 = vmatpush.msra.mxu0 0.0
    %1587 = vmatpush.msra.mxu0 0.0
    %1588 = vmatpush.msra.mxu0 0.0
    %1589 = vmatpush.msra.mxu0 0.0
    %1590 = vmatpush.msra.mxu0 0.0
    %1591 = vmatpush.msra.mxu0 0.0
    %1592 = vmatpush.msra.mxu0 0.0
    %1593 = vmatpush.msra.mxu0 0.0
    %1594 = vmatpush.msra.mxu0 0.0
    %1595 = vmatpush.msra.mxu0 %v79
    %1596 = vmatmul.f32.gmra.mxu0 %v1578
    %v1597 = vpop.f32.mrf.mxu0
    %v1598 = vadd.f32 %v1575, %v1597
    %1599 = vdwg.mxu0
    %v1600 = vadd.f32 %v1598, %v144
    %v1601 = vxor.u32 %v1600, 2147483648
    %v1602 = vmul.f32 %v1601, 1.442695
    %v1603 = vpow.pop %v1602
    %v1604 = vadd.f32 %v1603, 1.0
    %v1605 = vrcp.pop %v1604
    %v1606 = vmul.f32 %v1604, %v1605
    %v1607 = vsub.f32 1.0, %v1606
    %v1608 = vmul.f32 %v1605, %v1607
    %v1609 = vadd.f32 %v1605, %v1608
    %vm1610 = vweird.f32 %v1604
    %vm1611 = vweird.f32 %v1605
    %vm1612 = vmor %vm1610, %vm1611
    %v1613 = vsel %vm1612, %v1605, %v1609
    %v1614 = vand.u32 2147483647, %v1604
    %vm1615 = vcmp.eq.f32.partialorder %v1614, 8.507059e+37
    %v1616 = vand.u32 %v1604, 2147483648
    %v1617 = vor.u32 1.1754944e-38, %v1616
    %v1618 = vsel %vm1615, %v1617, %v1613
    %v1619 = vmul.f32 1.0, %v1618
    %v1620 = vtanh.pop %v1600
    %v1621 = vmul.f32 %v1619, %v1460
    %1623 = vrot.lane.b32.xlu0 %v1620, 64
    %v1624 = vpop.permute.xlu0 %1623
    %v1626 = vmul.f32 %v1619, %v1624
    %1628 = vrot.lane.b32.xlu0 %v1626, 32
    %v1629 = vpop.permute.xlu0 %1628
    %v1631 = vadd.f32 %v1621, %v1629
    %v1632 = vtanh.pop %v1631
    %1634 = vrot.lane.b32.xlu0 %v1632, 64
    %v1635 = vpop.permute.xlu0 %1634
    %v1637 = vmul.f32 %v1619, %v1635
    %1639 = vrot.lane.b32.xlu0 %v1549, 32
    %v1640 = vpop.permute.xlu0 %1639
    %v1641 = vsel %vm95, %v1640, 0
    %1643 = vmatpush.msra.mxu0 0.0
    %1644 = vmatpush.msra.mxu0 0.0
    %1645 = vmatpush.msra.mxu0 0.0
    %1646 = vmatpush.msra.mxu0 0.0
    %1647 = vmatpush.msra.mxu0 0.0
    %1648 = vmatpush.msra.mxu0 0.0
    %1649 = vmatpush.msra.mxu0 0.0
    %1650 = vmatpush.msra.mxu0 0.0
    %1651 = vmatpush.msra.mxu0 0.0
    %1652 = vmatpush.msra.mxu0 0.0
    %1653 = vmatpush.msra.mxu0 0.0
    %1654 = vmatpush.msra.mxu0 0.0
    %1655 = vmatpush.msra.mxu0 %v91
    %1656 = vmatpush.msra.mxu0 %v90
    %1657 = vmatpush.msra.mxu0 %v89
    %1658 = vmatpush.msra.mxu0 %v88
    %1659 = vmatmul.f32.gmra.mxu0 %v1641
    %v1660 = vpop.f32.mrf.mxu0
    %v1661 = vadd.f32 0.0, %v1660
    %1662 = vdwg.mxu0
    %1663 = vmatpush.msra.mxu0 0.0
    %1664 = vmatpush.msra.mxu0 0.0
    %1665 = vmatpush.msra.mxu0 0.0
    %1666 = vmatpush.msra.mxu0 0.0
    %1667 = vmatpush.msra.mxu0 0.0
    %1668 = vmatpush.msra.mxu0 0.0
    %1669 = vmatpush.msra.mxu0 0.0
    %1670 = vmatpush.msra.mxu0 0.0
    %1671 = vmatpush.msra.mxu0 0.0
    %1672 = vmatpush.msra.mxu0 0.0
    %1673 = vmatpush.msra.mxu0 0.0
    %1674 = vmatpush.msra.mxu0 0.0
    %1675 = vmatpush.msra.mxu0 %v83
    %1676 = vmatpush.msra.mxu0 %v82
    %1677 = vmatpush.msra.mxu0 %v81
    %1678 = vmatpush.msra.mxu0 %v80
    %1679 = vmatmul.f32.gmra.mxu0 %v1555
    %v1680 = vpop.f32.mrf.mxu0
    %v1681 = vadd.f32 %v1661, %v1680
    %1682 = vdwg.mxu0
    %v1683 = vadd.f32 %v1681, %v313
    %v1684 = vxor.u32 %v1683, 2147483648
    %v1685 = vmul.f32 %v1684, 1.442695
    %v1686 = vpow.pop %v1685
    %v1687 = vadd.f32 %v1686, 1.0
    %v1688 = vrcp.pop %v1687
    %v1689 = vmul.f32 %v1687, %v1688
    %v1690 = vsub.f32 1.0, %v1689
    %v1691 = vmul.f32 %v1688, %v1690
    %v1692 = vadd.f32 %v1688, %v1691
    %vm1693 = vweird.f32 %v1687
    %vm1694 = vweird.f32 %v1688
    %vm1695 = vmor %vm1693, %vm1694
    %v1696 = vsel %vm1695, %v1688, %v1692
    %v1697 = vand.u32 2147483647, %v1687
    %vm1698 = vcmp.eq.f32.partialorder %v1697, 8.507059e+37
    %v1699 = vand.u32 %v1687, 2147483648
    %v1700 = vor.u32 1.1754944e-38, %v1699
    %v1701 = vsel %vm1698, %v1700, %v1696
    %v1702 = vmul.f32 1.0, %v1701
    %v1703 = vtanh.pop %v1683
    %v1704 = vmul.f32 %v1702, %v1543
    %1706 = vrot.lane.b32.xlu0 %v1703, 64
    %v1707 = vpop.permute.xlu0 %1706
    %v1709 = vmul.f32 %v1702, %v1707
    %1711 = vrot.lane.b32.xlu0 %v1709, 32
    %v1712 = vpop.permute.xlu0 %1711
    %v1714 = vadd.f32 %v1704, %v1712
    %v1715 = vtanh.pop %v1714
    %1717 = vrot.lane.b32.xlu0 %v1715, 64
    %v1718 = vpop.permute.xlu0 %1717
    %v1720 = vmul.f32 %v1702, %v1718
    %s1721 = scalar_lea.vmem %s0, 20
    %v1722 = vld [vmem:[%s1721] sm:$0x3]
    %1724 = vrot.lane.b32.xlu0 %v1637, 32
    %v1725 = vpop.permute.xlu0 %1724
    %v1726 = vsel %vm95, %v1725, 0
    %1728 = vmatpush.msra.mxu0 0.0
    %1729 = vmatpush.msra.mxu0 0.0
    %1730 = vmatpush.msra.mxu0 0.0
    %1731 = vmatpush.msra.mxu0 0.0
    %1732 = vmatpush.msra.mxu0 0.0
    %1733 = vmatpush.msra.mxu0 0.0
    %1734 = vmatpush.msra.mxu0 0.0
    %1735 = vmatpush.msra.mxu0 0.0
    %1736 = vmatpush.msra.mxu0 0.0
    %1737 = vmatpush.msra.mxu0 0.0
    %1738 = vmatpush.msra.mxu0 0.0
    %1739 = vmatpush.msra.mxu0 0.0
    %1740 = vmatpush.msra.mxu0 %v87
    %1741 = vmatpush.msra.mxu0 %v86
    %1742 = vmatpush.msra.mxu0 %v85
    %1743 = vmatpush.msra.mxu0 %v84
    %1744 = vmatmul.f32.gmra.mxu0 %v1726
    %v1745 = vpop.f32.mrf.mxu0
    %v1746 = vadd.f32 0.0, %v1745
    %1747 = vdwg.mxu0
    %v1749 = vsel %vm119, %v1722, 0
    %1751 = vmatpush.msra.mxu0 0.0
    %1752 = vmatpush.msra.mxu0 0.0
    %1753 = vmatpush.msra.mxu0 0.0
    %1754 = vmatpush.msra.mxu0 0.0
    %1755 = vmatpush.msra.mxu0 0.0
    %1756 = vmatpush.msra.mxu0 0.0
    %1757 = vmatpush.msra.mxu0 0.0
    %1758 = vmatpush.msra.mxu0 0.0
    %1759 = vmatpush.msra.mxu0 0.0
    %1760 = vmatpush.msra.mxu0 0.0
    %1761 = vmatpush.msra.mxu0 0.0
    %1762 = vmatpush.msra.mxu0 0.0
    %1763 = vmatpush.msra.mxu0 0.0
    %1764 = vmatpush.msra.mxu0 0.0
    %1765 = vmatpush.msra.mxu0 0.0
    %1766 = vmatpush.msra.mxu0 %v79
    %1767 = vmatmul.f32.gmra.mxu0 %v1749
    %v1768 = vpop.f32.mrf.mxu0
    %v1769 = vadd.f32 %v1746, %v1768
    %1770 = vdwg.mxu0
    %v1771 = vadd.f32 %v1769, %v144
    %v1772 = vxor.u32 %v1771, 2147483648
    %v1773 = vmul.f32 %v1772, 1.442695
    %v1774 = vpow.pop %v1773
    %v1775 = vadd.f32 %v1774, 1.0
    %v1776 = vrcp.pop %v1775
    %v1777 = vmul.f32 %v1775, %v1776
    %v1778 = vsub.f32 1.0, %v1777
    %v1779 = vmul.f32 %v1776, %v1778
    %v1780 = vadd.f32 %v1776, %v1779
    %vm1781 = vweird.f32 %v1775
    %vm1782 = vweird.f32 %v1776
    %vm1783 = vmor %vm1781, %vm1782
    %v1784 = vsel %vm1783, %v1776, %v1780
    %v1785 = vand.u32 2147483647, %v1775
    %vm1786 = vcmp.eq.f32.partialorder %v1785, 8.507059e+37
    %v1787 = vand.u32 %v1775, 2147483648
    %v1788 = vor.u32 1.1754944e-38, %v1787
    %v1789 = vsel %vm1786, %v1788, %v1784
    %v1790 = vmul.f32 1.0, %v1789
    %v1791 = vtanh.pop %v1771
    %v1792 = vmul.f32 %v1790, %v1631
    %1794 = vrot.lane.b32.xlu0 %v1791, 64
    %v1795 = vpop.permute.xlu0 %1794
    %v1797 = vmul.f32 %v1790, %v1795
    %1799 = vrot.lane.b32.xlu0 %v1797, 32
    %v1800 = vpop.permute.xlu0 %1799
    %v1802 = vadd.f32 %v1792, %v1800
    %v1803 = vtanh.pop %v1802
    %1805 = vrot.lane.b32.xlu0 %v1803, 64
    %v1806 = vpop.permute.xlu0 %1805
    %v1808 = vmul.f32 %v1790, %v1806
    %1810 = vrot.lane.b32.xlu0 %v1720, 32
    %v1811 = vpop.permute.xlu0 %1810
    %v1812 = vsel %vm95, %v1811, 0
    %1814 = vmatpush.msra.mxu0 0.0
    %1815 = vmatpush.msra.mxu0 0.0
    %1816 = vmatpush.msra.mxu0 0.0
    %1817 = vmatpush.msra.mxu0 0.0
    %1818 = vmatpush.msra.mxu0 0.0
    %1819 = vmatpush.msra.mxu0 0.0
    %1820 = vmatpush.msra.mxu0 0.0
    %1821 = vmatpush.msra.mxu0 0.0
    %1822 = vmatpush.msra.mxu0 0.0
    %1823 = vmatpush.msra.mxu0 0.0
    %1824 = vmatpush.msra.mxu0 0.0
    %1825 = vmatpush.msra.mxu0 0.0
    %1826 = vmatpush.msra.mxu0 %v91
    %1827 = vmatpush.msra.mxu0 %v90
    %1828 = vmatpush.msra.mxu0 %v89
    %1829 = vmatpush.msra.mxu0 %v88
    %1830 = vmatmul.f32.gmra.mxu0 %v1812
    %v1831 = vpop.f32.mrf.mxu0
    %v1832 = vadd.f32 0.0, %v1831
    %1833 = vdwg.mxu0
    %1834 = vmatpush.msra.mxu0 0.0
    %1835 = vmatpush.msra.mxu0 0.0
    %1836 = vmatpush.msra.mxu0 0.0
    %1837 = vmatpush.msra.mxu0 0.0
    %1838 = vmatpush.msra.mxu0 0.0
    %1839 = vmatpush.msra.mxu0 0.0
    %1840 = vmatpush.msra.mxu0 0.0
    %1841 = vmatpush.msra.mxu0 0.0
    %1842 = vmatpush.msra.mxu0 0.0
    %1843 = vmatpush.msra.mxu0 0.0
    %1844 = vmatpush.msra.mxu0 0.0
    %1845 = vmatpush.msra.mxu0 0.0
    %1846 = vmatpush.msra.mxu0 %v83
    %1847 = vmatpush.msra.mxu0 %v82
    %1848 = vmatpush.msra.mxu0 %v81
    %1849 = vmatpush.msra.mxu0 %v80
    %1850 = vmatmul.f32.gmra.mxu0 %v1726
    %v1851 = vpop.f32.mrf.mxu0
    %v1852 = vadd.f32 %v1832, %v1851
    %1853 = vdwg.mxu0
    %v1854 = vadd.f32 %v1852, %v313
    %v1855 = vxor.u32 %v1854, 2147483648
    %v1856 = vmul.f32 %v1855, 1.442695
    %v1857 = vpow.pop %v1856
    %v1858 = vadd.f32 %v1857, 1.0
    %v1859 = vrcp.pop %v1858
    %v1860 = vmul.f32 %v1858, %v1859
    %v1861 = vsub.f32 1.0, %v1860
    %v1862 = vmul.f32 %v1859, %v1861
    %v1863 = vadd.f32 %v1859, %v1862
    %vm1864 = vweird.f32 %v1858
    %vm1865 = vweird.f32 %v1859
    %vm1866 = vmor %vm1864, %vm1865
    %v1867 = vsel %vm1866, %v1859, %v1863
    %v1868 = vand.u32 2147483647, %v1858
    %vm1869 = vcmp.eq.f32.partialorder %v1868, 8.507059e+37
    %v1870 = vand.u32 %v1858, 2147483648
    %v1871 = vor.u32 1.1754944e-38, %v1870
    %v1872 = vsel %vm1869, %v1871, %v1867
    %v1873 = vmul.f32 1.0, %v1872
    %v1874 = vtanh.pop %v1854
    %v1875 = vmul.f32 %v1873, %v1714
    %1877 = vrot.lane.b32.xlu0 %v1874, 64
    %v1878 = vpop.permute.xlu0 %1877
    %v1880 = vmul.f32 %v1873, %v1878
    %1882 = vrot.lane.b32.xlu0 %v1880, 32
    %v1883 = vpop.permute.xlu0 %1882
    %v1885 = vadd.f32 %v1875, %v1883
    %v1886 = vtanh.pop %v1885
    %1888 = vrot.lane.b32.xlu0 %v1886, 64
    %v1889 = vpop.permute.xlu0 %1888
    %v1891 = vmul.f32 %v1873, %v1889
    %s1892 = scalar_lea.vmem %s0, 22
    %v1893 = vld [vmem:[%s1892] sm:$0x3]
    %1895 = vrot.lane.b32.xlu0 %v1808, 32
    %v1896 = vpop.permute.xlu0 %1895
    %v1897 = vsel %vm95, %v1896, 0
    %1899 = vmatpush.msra.mxu0 0.0
    %1900 = vmatpush.msra.mxu0 0.0
    %1901 = vmatpush.msra.mxu0 0.0
    %1902 = vmatpush.msra.mxu0 0.0
    %1903 = vmatpush.msra.mxu0 0.0
    %1904 = vmatpush.msra.mxu0 0.0
    %1905 = vmatpush.msra.mxu0 0.0
    %1906 = vmatpush.msra.mxu0 0.0
    %1907 = vmatpush.msra.mxu0 0.0
    %1908 = vmatpush.msra.mxu0 0.0
    %1909 = vmatpush.msra.mxu0 0.0
    %1910 = vmatpush.msra.mxu0 0.0
    %1911 = vmatpush.msra.mxu0 %v87
    %1912 = vmatpush.msra.mxu0 %v86
    %1913 = vmatpush.msra.mxu0 %v85
    %1914 = vmatpush.msra.mxu0 %v84
    %1915 = vmatmul.f32.gmra.mxu0 %v1897
    %v1916 = vpop.f32.mrf.mxu0
    %v1917 = vadd.f32 0.0, %v1916
    %1918 = vdwg.mxu0
    %v1920 = vsel %vm119, %v1893, 0
    %1922 = vmatpush.msra.mxu0 0.0
    %1923 = vmatpush.msra.mxu0 0.0
    %1924 = vmatpush.msra.mxu0 0.0
    %1925 = vmatpush.msra.mxu0 0.0
    %1926 = vmatpush.msra.mxu0 0.0
    %1927 = vmatpush.msra.mxu0 0.0
    %1928 = vmatpush.msra.mxu0 0.0
    %1929 = vmatpush.msra.mxu0 0.0
    %1930 = vmatpush.msra.mxu0 0.0
    %1931 = vmatpush.msra.mxu0 0.0
    %1932 = vmatpush.msra.mxu0 0.0
    %1933 = vmatpush.msra.mxu0 0.0
    %1934 = vmatpush.msra.mxu0 0.0
    %1935 = vmatpush.msra.mxu0 0.0
    %1936 = vmatpush.msra.mxu0 0.0
    %1937 = vmatpush.msra.mxu0 %v79
    %1938 = vmatmul.f32.gmra.mxu0 %v1920
    %v1939 = vpop.f32.mrf.mxu0
    %v1940 = vadd.f32 %v1917, %v1939
    %1941 = vdwg.mxu0
    %v1942 = vadd.f32 %v1940, %v144
    %v1943 = vxor.u32 %v1942, 2147483648
    %v1944 = vmul.f32 %v1943, 1.442695
    %v1945 = vpow.pop %v1944
    %v1946 = vadd.f32 %v1945, 1.0
    %v1947 = vrcp.pop %v1946
    %v1948 = vmul.f32 %v1946, %v1947
    %v1949 = vsub.f32 1.0, %v1948
    %v1950 = vmul.f32 %v1947, %v1949
    %v1951 = vadd.f32 %v1947, %v1950
    %vm1952 = vweird.f32 %v1946
    %vm1953 = vweird.f32 %v1947
    %vm1954 = vmor %vm1952, %vm1953
    %v1955 = vsel %vm1954, %v1947, %v1951
    %v1956 = vand.u32 2147483647, %v1946
    %vm1957 = vcmp.eq.f32.partialorder %v1956, 8.507059e+37
    %v1958 = vand.u32 %v1946, 2147483648
    %v1959 = vor.u32 1.1754944e-38, %v1958
    %v1960 = vsel %vm1957, %v1959, %v1955
    %v1961 = vmul.f32 1.0, %v1960
    %v1962 = vtanh.pop %v1942
    %v1963 = vmul.f32 %v1961, %v1802
    %1965 = vrot.lane.b32.xlu0 %v1962, 64
    %v1966 = vpop.permute.xlu0 %1965
    %v1968 = vmul.f32 %v1961, %v1966
    %1970 = vrot.lane.b32.xlu0 %v1968, 32
    %v1971 = vpop.permute.xlu0 %1970
    %v1973 = vadd.f32 %v1963, %v1971
    %v1974 = vtanh.pop %v1973
    %1976 = vrot.lane.b32.xlu0 %v1974, 64
    %v1977 = vpop.permute.xlu0 %1976
    %v1979 = vmul.f32 %v1961, %v1977
    %1981 = vrot.lane.b32.xlu0 %v1891, 32
    %v1982 = vpop.permute.xlu0 %1981
    %v1983 = vsel %vm95, %v1982, 0
    %1985 = vmatpush.msra.mxu0 0.0
    %1986 = vmatpush.msra.mxu0 0.0
    %1987 = vmatpush.msra.mxu0 0.0
    %1988 = vmatpush.msra.mxu0 0.0
    %1989 = vmatpush.msra.mxu0 0.0
    %1990 = vmatpush.msra.mxu0 0.0
    %1991 = vmatpush.msra.mxu0 0.0
    %1992 = vmatpush.msra.mxu0 0.0
    %1993 = vmatpush.msra.mxu0 0.0
    %1994 = vmatpush.msra.mxu0 0.0
    %1995 = vmatpush.msra.mxu0 0.0
    %1996 = vmatpush.msra.mxu0 0.0
    %1997 = vmatpush.msra.mxu0 %v91
    %1998 = vmatpush.msra.mxu0 %v90
    %1999 = vmatpush.msra.mxu0 %v89
    %2000 = vmatpush.msra.mxu0 %v88
    %2001 = vmatmul.f32.gmra.mxu0 %v1983
    %v2002 = vpop.f32.mrf.mxu0
    %v2003 = vadd.f32 0.0, %v2002
    %2004 = vdwg.mxu0
    %2005 = vmatpush.msra.mxu0 0.0
    %2006 = vmatpush.msra.mxu0 0.0
    %2007 = vmatpush.msra.mxu0 0.0
    %2008 = vmatpush.msra.mxu0 0.0
    %2009 = vmatpush.msra.mxu0 0.0
    %2010 = vmatpush.msra.mxu0 0.0
    %2011 = vmatpush.msra.mxu0 0.0
    %2012 = vmatpush.msra.mxu0 0.0
    %2013 = vmatpush.msra.mxu0 0.0
    %2014 = vmatpush.msra.mxu0 0.0
    %2015 = vmatpush.msra.mxu0 0.0
    %2016 = vmatpush.msra.mxu0 0.0
    %2017 = vmatpush.msra.mxu0 %v83
    %2018 = vmatpush.msra.mxu0 %v82
    %2019 = vmatpush.msra.mxu0 %v81
    %2020 = vmatpush.msra.mxu0 %v80
    %2021 = vmatmul.f32.gmra.mxu0 %v1897
    %v2022 = vpop.f32.mrf.mxu0
    %v2023 = vadd.f32 %v2003, %v2022
    %2024 = vdwg.mxu0
    %v2025 = vadd.f32 %v2023, %v313
    %v2026 = vxor.u32 %v2025, 2147483648
    %v2027 = vmul.f32 %v2026, 1.442695
    %v2028 = vpow.pop %v2027
    %v2029 = vadd.f32 %v2028, 1.0
    %v2030 = vrcp.pop %v2029
    %v2031 = vmul.f32 %v2029, %v2030
    %v2032 = vsub.f32 1.0, %v2031
    %v2033 = vmul.f32 %v2030, %v2032
    %v2034 = vadd.f32 %v2030, %v2033
    %vm2035 = vweird.f32 %v2029
    %vm2036 = vweird.f32 %v2030
    %vm2037 = vmor %vm2035, %vm2036
    %v2038 = vsel %vm2037, %v2030, %v2034
    %v2039 = vand.u32 2147483647, %v2029
    %vm2040 = vcmp.eq.f32.partialorder %v2039, 8.507059e+37
    %v2041 = vand.u32 %v2029, 2147483648
    %v2042 = vor.u32 1.1754944e-38, %v2041
    %v2043 = vsel %vm2040, %v2042, %v2038
    %v2044 = vmul.f32 1.0, %v2043
    %v2045 = vtanh.pop %v2025
    %v2046 = vmul.f32 %v2044, %v1885
    %2048 = vrot.lane.b32.xlu0 %v2045, 64
    %v2049 = vpop.permute.xlu0 %2048
    %v2051 = vmul.f32 %v2044, %v2049
    %2053 = vrot.lane.b32.xlu0 %v2051, 32
    %v2054 = vpop.permute.xlu0 %2053
    %v2056 = vadd.f32 %v2046, %v2054
    %v2057 = vtanh.pop %v2056
    %2059 = vrot.lane.b32.xlu0 %v2057, 64
    %v2060 = vpop.permute.xlu0 %2059
    %v2062 = vmul.f32 %v2044, %v2060
    %2064 = vrot.lane.b32.xlu0 %v2062, 32
    %v2065 = vpop.permute.xlu0 %2064
    %v2066 = vsel %vm95, %v2065, 0
    %2068 = vmatpush.msra.mxu0 0.0
    %2069 = vmatpush.msra.mxu0 0.0
    %2070 = vmatpush.msra.mxu0 0.0
    %2071 = vmatpush.msra.mxu0 0.0
    %2072 = vmatpush.msra.mxu0 0.0
    %2073 = vmatpush.msra.mxu0 0.0
    %2074 = vmatpush.msra.mxu0 0.0
    %2075 = vmatpush.msra.mxu0 0.0
    %2076 = vmatpush.msra.mxu0 0.0
    %2077 = vmatpush.msra.mxu0 0.0
    %2078 = vmatpush.msra.mxu0 0.0
    %2079 = vmatpush.msra.mxu0 0.0
    %2080 = vmatpush.msra.mxu0 %v91
    %2081 = vmatpush.msra.mxu0 %v90
    %2082 = vmatpush.msra.mxu0 %v89
    %2083 = vmatpush.msra.mxu0 %v88
    %2084 = vmatmul.f32.gmra.mxu0 %v2066
    %v2085 = vpop.f32.mrf.mxu0
    %v2086 = vadd.f32 0.0, %v2085
    %2087 = vdwg.mxu0
    %2089 = vrot.lane.b32.xlu0 %v1979, 32
    %v2090 = vpop.permute.xlu0 %2089
    %v2091 = vsel %vm95, %v2090, 0
    %2093 = vmatpush.msra.mxu0 0.0
    %2094 = vmatpush.msra.mxu0 0.0
    %2095 = vmatpush.msra.mxu0 0.0
    %2096 = vmatpush.msra.mxu0 0.0
    %2097 = vmatpush.msra.mxu0 0.0
    %2098 = vmatpush.msra.mxu0 0.0
    %2099 = vmatpush.msra.mxu0 0.0
    %2100 = vmatpush.msra.mxu0 0.0
    %2101 = vmatpush.msra.mxu0 0.0
    %2102 = vmatpush.msra.mxu0 0.0
    %2103 = vmatpush.msra.mxu0 0.0
    %2104 = vmatpush.msra.mxu0 0.0
    %2105 = vmatpush.msra.mxu0 %v83
    %2106 = vmatpush.msra.mxu0 %v82
    %2107 = vmatpush.msra.mxu0 %v81
    %2108 = vmatpush.msra.mxu0 %v80
    %2109 = vmatmul.f32.gmra.mxu0 %v2091
    %v2110 = vpop.f32.mrf.mxu0
    %v2111 = vadd.f32 %v2086, %v2110
    %2112 = vdwg.mxu0
    %v2113 = vadd.f32 %v2111, %v313
    %v2114 = vxor.u32 %v2113, 2147483648
    %v2115 = vmul.f32 %v2114, 1.442695
    %v2116 = vpow.pop %v2115
    %v2117 = vadd.f32 %v2116, 1.0
    %v2118 = vrcp.pop %v2117
    %v2119 = vmul.f32 %v2117, %v2118
    %v2120 = vsub.f32 1.0, %v2119
    %v2121 = vmul.f32 %v2118, %v2120
    %v2122 = vadd.f32 %v2118, %v2121
    %vm2123 = vweird.f32 %v2117
    %vm2124 = vweird.f32 %v2118
    %vm2125 = vmor %vm2123, %vm2124
    %v2126 = vsel %vm2125, %v2118, %v2122
    %v2127 = vand.u32 2147483647, %v2117
    %vm2128 = vcmp.eq.f32.partialorder %v2127, 8.507059e+37
    %v2129 = vand.u32 %v2117, 2147483648
    %v2130 = vor.u32 1.1754944e-38, %v2129
    %v2131 = vsel %vm2128, %v2130, %v2126
    %v2132 = vmul.f32 1.0, %v2131
    %v2133 = vtanh.pop %v2113
    %v2134 = vmul.f32 %v2132, %v2056
    %2136 = vrot.lane.b32.xlu0 %v2133, 64
    %v2137 = vpop.permute.xlu0 %2136
    %v2139 = vmul.f32 %v2132, %v2137
    %2141 = vrot.lane.b32.xlu0 %v2139, 32
    %v2142 = vpop.permute.xlu0 %2141
    %v2144 = vadd.f32 %v2134, %v2142
    %v2145 = vtanh.pop %v2144
    %2147 = vrot.lane.b32.xlu0 %v2145, 64
    %v2148 = vpop.permute.xlu0 %2147
    %v2150 = vmul.f32 %v2132, %v2148
    %v2151 = vld [vmem:[#allocation6] sm:$0xff]
    %v2152 = vld [vmem:[#allocation6 + $0x8] sm:$0xff]
    %v2153 = vld [vmem:[#allocation6 + $0x10] sm:$0xff]
    %v2154 = vld [vmem:[#allocation6 + $0x18] sm:$0xff]
    %v2155 = vld [vmem:[%s8] sm:$0x1]
    %v2157 = vperm.slane %v2155, 0
    %2160 = vrot.lane.b32.xlu0 %v2150, 32
    %v2161 = vpop.permute.xlu0 %2160
    %v2162 = vsel %vm95, %v2161, 0
    %2164 = vmatpush.msra.mxu0 0.0
    %2165 = vmatpush.msra.mxu0 0.0
    %2166 = vmatpush.msra.mxu0 0.0
    %2167 = vmatpush.msra.mxu0 0.0
    %2168 = vmatpush.msra.mxu0 0.0
    %2169 = vmatpush.msra.mxu0 0.0
    %2170 = vmatpush.msra.mxu0 0.0
    %2171 = vmatpush.msra.mxu0 0.0
    %2172 = vmatpush.msra.mxu0 0.0
    %2173 = vmatpush.msra.mxu0 0.0
    %2174 = vmatpush.msra.mxu0 0.0
    %2175 = vmatpush.msra.mxu0 0.0
    %2176 = vmatpush.msra.mxu0 %v2154
    %2177 = vmatpush.msra.mxu0 %v2153
    %2178 = vmatpush.msra.mxu0 %v2152
    %2179 = vmatpush.msra.mxu0 %v2151
    %2180 = vmatmul.f32.gmra.mxu0 %v2162
    %v2181 = vpop.f32.mrf.mxu0
    %v2182 = vadd.f32 %v2157, %v2181
    %2183 = vdwg.mxu0
    %2184 = vst [vmem:[%s9] sm:$0x3] %v2182
    // Predicated region
    $region50: #{lstm_predictor_forward.1} parent=1 // pred_check
      _
    $region51: #{lstm_predictor_forward.1} parent=1 // pred_check_branch
      %2186 = sbr.rel (0) target = $region53
    $region52: #{lstm_predictor_forward.1} parent=1 // pred_region
      _
    $region53: #{lstm_predictor_forward.1} parent=1 // pred_fallthru
      _
    // Predicated region
    $region54: #{lstm_predictor_forward.1} parent=1 // pred_check
      _
    $region55: #{lstm_predictor_forward.1} parent=1 // pred_check_branch
      %2188 = sbr.rel (0) target = $region57
    $region56: #{lstm_predictor_forward.1} parent=1 // pred_region
      _
    $region57: #{lstm_predictor_forward.1} parent=1 // pred_fallthru
      _
    %2189 = vsyncpa [#allocation3], 1
    %2190 = vsyncpa [#allocation5], 1

</llo_original>
